<compile_context>
chip_gen: v7x
topology: tpu7x:2x2x1
jax: 0.10.0
libtpu: 0.0.40
codegen_flags: <defaults>
</compile_context>

<pallas_src>
import functools

import numpy as np
import jax
import jax.numpy as jnp
from jax.experimental import pallas as pl
from jax.experimental.pallas import tpu as pltpu


def _transformer_layer_kernel(
    x_ref, cos_ref, sin_ref, attw_ref,
    qw_ref, qb_ref, kw_ref, kb_ref, vw_ref, vb_ref, ow_ref, ob_ref,
    ffnw_ref, w0_ref, b0_ref, w1_ref, b1_ref, w2_ref, b2_ref,
    o_ref, *, n_q_heads, n_kv_heads, head_size):
    f32 = jnp.float32
    bf16 = jnp.bfloat16
    x = x_ref[...]                      # (S, D) f32 -- one batch element per grid step
    S = x.shape[0]
    group = n_q_heads // n_kv_heads
    half = head_size // 2

    def rmsnorm(v, w):
        ms = jnp.mean(v * v, axis=-1, keepdims=True)
        # keep module semantics: w * v / (sqrt(ms) + eps); reciprocal on the EUP slot
        inv = pl.reciprocal(jnp.sqrt(ms) + 1e-6, approx=True)
        return w * v * inv

    # ---------------- attention branch ----------------
    xn = rmsnorm(x, attw_ref[...])
    xn16 = xn.astype(bf16)

    q = jnp.dot(xn16, qw_ref[...], preferred_element_type=f32) + qb_ref[...]   # (S, Hq)
    k = jnp.dot(xn16, kw_ref[...], preferred_element_type=f32) + kb_ref[...]   # (S, Hkv)
    v = jnp.dot(xn16, vw_ref[...], preferred_element_type=f32) + vb_ref[...]   # (S, Hkv)

    # head-major (H, S, head_size) layout via static slices (layout work only; all
    # matmuls below are head-batched)
    q3 = jnp.stack([q[:, h * head_size:(h + 1) * head_size]
                    for h in range(n_q_heads)], axis=0)        # (Hq_heads, S, hd)
    k3 = jnp.stack([k[:, h * head_size:(h + 1) * head_size]
                    for h in range(n_kv_heads)], axis=0)       # (Hkv_heads, S, hd)
    v3 = jnp.stack([v[:, h * head_size:(h + 1) * head_size]
                    for h in range(n_kv_heads)], axis=0)

    # RoPE in rotate-half layout (weights were column-permuted in the wrapper):
    # out = x*cos + swap_halves(x)*sin_signed  -- no MXU work, tables are (S, hd)
    cos = cos_ref[...][None]            # (1, S, hd) f32
    sin = sin_ref[...][None]            # (1, S, hd) f32, sign pre-folded

    def rope(t):
        sw = jnp.concatenate([t[..., half:], t[..., :half]], axis=-1)
        return t * cos + sw * sin

    q3 = rope(q3)
    k3 = rope(k3)

    # GQA: broadcast kv heads over the q-head group (q head h uses kv head h % n_kv,
    # matching the torch tile-over-group mapping)
    if group > 1:
        k3 = jnp.concatenate([k3] * group, axis=0)             # (Hq_heads, S, hd)
        v3 = jnp.concatenate([v3] * group, axis=0)

    scale = 1.0 / (head_size ** 0.5)
    s = jnp.einsum('hqd,hkd->hqk', q3.astype(bf16), k3.astype(bf16),
                   preferred_element_type=f32) * scale          # (H, S, S) f32
    row = jax.lax.broadcasted_iota(jnp.int32, (S, S), 0)
    col = jax.lax.broadcasted_iota(jnp.int32, (S, S), 1)
    s = jnp.where((col <= row)[None], s, -1e30)                 # causal, f32 scores

    m = jnp.max(s, axis=-1, keepdims=True)
    p = jnp.exp(s - m)
    l = jnp.sum(p, axis=-1, keepdims=True)
    p = p * pl.reciprocal(l, approx=True)                       # EUP reciprocal

    o3 = jnp.einsum('hqk,hkd->hqd', p.astype(bf16), v3.astype(bf16),
                    preferred_element_type=f32)                 # (H, S, hd)

    # back to (S, Hq) for the output projection (v was not permuted, so ow is untouched)
    o_flat = jnp.concatenate([o3[h] for h in range(n_q_heads)], axis=-1)
    att = jnp.dot(o_flat.astype(bf16), ow_ref[...],
                  preferred_element_type=f32) + ob_ref[...]
    h1 = x + att

    # ---------------- FFN branch (SwiGLU) ----------------
    yn = rmsnorm(h1, ffnw_ref[...])
    yn16 = yn.astype(bf16)
    o0 = jnp.dot(yn16, w0_ref[...], preferred_element_type=f32) + b0_ref[...]
    o1 = jnp.dot(yn16, w1_ref[...], preferred_element_type=f32) + b1_ref[...]
    g = o1 * jax.nn.sigmoid(o1)                                 # SiLU in f32
    ffn = jnp.dot((o0 * g).astype(bf16), w2_ref[...],
                  preferred_element_type=f32) + b2_ref[...]

    o_ref[...] = h1 + ffn


def transformer_layer(x, freq_cos, freq_sin, params, *, n_q_heads, n_kv_heads):
    B, S, D = x.shape
    Hq = params["qw"].shape[1]
    head_size = Hq // n_q_heads
    half = head_size // 2
    bf16 = jnp.bfloat16

    # ---- glue: per-head rotate-half column permutation for q/k weights & biases ----
    # new within-head order = [even cols (real parts), odd cols (imag parts)]
    def head_perm(n_heads):
        idx = []
        for h in range(n_heads):
            base = h * head_size
            idx += [base + 2 * j for j in range(half)]
            idx += [base + 2 * j + 1 for j in range(half)]
        return np.asarray(idx, np.int32)

    pq = head_perm(n_q_heads)
    pk = head_perm(n_kv_heads)

    qw = params["qw"][:, pq].astype(bf16)
    qb = params["qb"][:, pq]
    kw = params["kw"][:, pk].astype(bf16)
    kb = params["kb"][:, pk]
    vw = params["vw"].astype(bf16)
    ow = params["ow"].astype(bf16)
    w0 = params["w0"].astype(bf16)
    w1 = params["w1"].astype(bf16)
    w2 = params["w2"].astype(bf16)

    # slim RoPE tables: (S, head_size), sign folded into sin for the swapped half
    cos2 = jnp.concatenate([freq_cos[:S], freq_cos[:S]], axis=-1).astype(jnp.float32)
    sin_signed = jnp.concatenate([-freq_sin[:S], freq_sin[:S]], axis=-1).astype(jnp.float32)

    ins = [cos2, sin_signed,
           params["att_w"], qw, qb, kw, kb, vw, params["vb"], ow, params["ob"],
           params["ffn_w"], w0, params["b0"], w1, params["b1"], w2, params["b2"]]

    def full_spec(a):
        return pl.BlockSpec(a.shape, lambda b: (0,) * a.ndim)

    kernel = functools.partial(_transformer_layer_kernel,
                               n_q_heads=n_q_heads, n_kv_heads=n_kv_heads,
                               head_size=head_size)

    return pl.pallas_call(
        kernel,
        out_shape=jax.ShapeDtypeStruct((B, S, D), x.dtype),
        grid=(B,),
        in_specs=[pl.BlockSpec((None, S, D), lambda b: (b, 0, 0))]
                 + [full_spec(a) for a in ins],
        out_specs=pl.BlockSpec((None, S, D), lambda b: (b, 0, 0)),
        compiler_params=pltpu.CompilerParams(dimension_semantics=("parallel",)),
    )(x, *ins)


# ---------------- pure-JAX f32 reference (matches the PyTorch forward) ----------------
def ref_transformer_layer(x, freq_cos, freq_sin, params, n_q_heads, n_kv_heads):
    B, S, D = x.shape
    head_size = params["qw"].shape[1] // n_q_heads
    group = n_q_heads // n_kv_heads

    def rms(v, w):
        return w * v / (jnp.sqrt(jnp.mean(v * v, -1, keepdims=True)) + 1e-6)

    def rope(t, cos, sin):
        tr, ti = t[..., 0::2], t[..., 1::2]
        c = cos[None, :, None, :]
        s = sin[None, :, None, :]
        orr = tr * c - ti * s
        oii = tr * s + ti * c
        return jnp.stack([orr, oii], axis=-1).reshape(t.shape)

    xn = rms(x, params["att_w"])
    q = xn @ params["qw"] + params["qb"]
    k = xn @ params["kw"] + params["kb"]
    v = xn @ params["vw"] + params["vb"]
    q = q.reshape(B, S, n_q_heads, head_size)
    k = k.reshape(B, S, n_kv_heads, head_size)
    v = v.reshape(B, S, n_kv_heads, head_size)
    q = rope(q, freq_cos[:S], freq_sin[:S])
    k = rope(k, freq_cos[:S], freq_sin[:S])
    q = q.transpose(0, 2, 1, 3)
    k = jnp.tile(k.transpose(0, 2, 1, 3), (1, group, 1, 1))
    v = jnp.tile(v.transpose(0, 2, 1, 3), (1, group, 1, 1))
    scale = 1.0 / head_size ** 0.5
    s = jnp.einsum("bhqd,bhkd->bhqk", q, k) * scale
    mask = jnp.tril(jnp.ones((S, S), bool))
    s = jnp.where(mask, s, -jnp.inf)
    p = jax.nn.softmax(s, axis=-1)
    o = jnp.einsum("bhqk,bhkd->bhqd", p, v).transpose(0, 2, 1, 3).reshape(B, S, -1)
    att = o @ params["ow"] + params["ob"]
    h1 = x + att
    yn = rms(h1, params["ffn_w"])
    o0 = yn @ params["w0"] + params["b0"]
    o1 = yn @ params["w1"] + params["b1"]
    ffn = (o0 * jax.nn.silu(o1)) @ params["w2"] + params["b2"]
    return h1 + ffn


if __name__ == "__main__":
    B, S, D = 2, 8, 32        # batch, seq, input_dim
    hide = 64                 # hide_dim
    n_q, n_kv = 4, 2
    hd = hide // n_q          # head_size = 16

    key = jax.random.PRNGKey(0)
    ks = jax.random.split(key, 16)

    def init(k, shape, scale=0.05):
        return (scale * jax.random.normal(k, shape)).astype(jnp.float32)

    params = dict(
        att_w=init(ks[0], (1, D), 1.0),
        qw=init(ks[1], (D, hide)),        qb=init(ks[2], (1, hide)),
        kw=init(ks[3], (D, n_kv * hd)),   kb=init(ks[4], (1, n_kv * hd)),
        vw=init(ks[5], (D, n_kv * hd)),   vb=init(ks[6], (1, n_kv * hd)),
        ow=init(ks[7], (hide, D)),        ob=init(ks[8], (1, D)),
        ffn_w=init(ks[9], (1, D), 1.0),
        w0=init(ks[10], (D, hide)),       b0=init(ks[11], (1, hide)),
        w1=init(ks[12], (D, hide)),       b1=init(ks[13], (1, hide)),
        w2=init(ks[14], (hide, D)),       b2=init(ks[15], (1, D)),
    )
    x = jax.random.normal(jax.random.PRNGKey(1), (B, S, D), jnp.float32)

    # rotary frequencies (freq_cis split into cos/sin), shape (S, head_size//2)
    theta = 10000.0
    inv = 1.0 / (theta ** (jnp.arange(0, hd, 2, dtype=jnp.float32) / hd))
    ang = jnp.arange(S, dtype=jnp.float32)[:, None] * inv[None, :]
    freq_cos, freq_sin = jnp.cos(ang), jnp.sin(ang)

    out = transformer_layer(x, freq_cos, freq_sin, params,
                            n_q_heads=n_q, n_kv_heads=n_kv)
    out = jax.block_until_ready(out)

    ref = ref_transformer_layer(x, freq_cos, freq_sin, params, n_q, n_kv)
    # kernel feeds bf16 operands to the MXU (f32 accumulation) and uses approx
    # EUP reciprocals, so compare against the f32 reference with a bf16-level tolerance
    np.testing.assert_allclose(np.asarray(out), np.asarray(ref), rtol=3e-2, atol=3e-2)
    print("KERNEL_OK")
</pallas_src>

<mosaic_0001>
module attributes {stable_mosaic.version = 11 : i64} {
  func.func @_transformer_layer_kernel(%arg0: i32, %arg1: memref<1x8x32xf32, #tpu.memory_space<vmem>>, %arg2: memref<8x16xf32, #tpu.memory_space<vmem>>, %arg3: memref<8x16xf32, #tpu.memory_space<vmem>>, %arg4: memref<1x32xf32, #tpu.memory_space<vmem>>, %arg5: memref<32x64xbf16, #tpu.memory_space<vmem>>, %arg6: memref<1x64xf32, #tpu.memory_space<vmem>>, %arg7: memref<32x32xbf16, #tpu.memory_space<vmem>>, %arg8: memref<1x32xf32, #tpu.memory_space<vmem>>, %arg9: memref<32x32xbf16, #tpu.memory_space<vmem>>, %arg10: memref<1x32xf32, #tpu.memory_space<vmem>>, %arg11: memref<64x32xbf16, #tpu.memory_space<vmem>>, %arg12: memref<1x32xf32, #tpu.memory_space<vmem>>, %arg13: memref<1x32xf32, #tpu.memory_space<vmem>>, %arg14: memref<32x64xbf16, #tpu.memory_space<vmem>>, %arg15: memref<1x64xf32, #tpu.memory_space<vmem>>, %arg16: memref<32x64xbf16, #tpu.memory_space<vmem>>, %arg17: memref<1x64xf32, #tpu.memory_space<vmem>>, %arg18: memref<64x32xbf16, #tpu.memory_space<vmem>>, %arg19: memref<1x32xf32, #tpu.memory_space<vmem>>, %arg20: memref<1x8x32xf32, #tpu.memory_space<vmem>>) attributes {dimension_semantics = [#tpu.dimension_semantics<parallel>], iteration_bounds = array<i64: 2>, scalar_prefetch = 0 : i64, scratch_operands = 0 : i64, tpu.core_type = #tpu.core_type<tc>, window_params = [{transform_indices = @transform_0, window_bounds = array<i64: 1, 8, 32>}, {pipeline_mode = #tpu.pipeline_mode<synchronous>, transform_indices = @transform_1, window_bounds = array<i64: 8, 16>}, {pipeline_mode = #tpu.pipeline_mode<synchronous>, transform_indices = @transform_2, window_bounds = array<i64: 8, 16>}, {pipeline_mode = #tpu.pipeline_mode<synchronous>, transform_indices = @transform_3, window_bounds = array<i64: 1, 32>}, {pipeline_mode = #tpu.pipeline_mode<synchronous>, transform_indices = @transform_4, window_bounds = array<i64: 32, 64>}, {pipeline_mode = #tpu.pipeline_mode<synchronous>, transform_indices = @transform_5, window_bounds = array<i64: 1, 64>}, {pipeline_mode = #tpu.pipeline_mode<synchronous>, transform_indices = @transform_6, window_bounds = array<i64: 32, 32>}, {pipeline_mode = #tpu.pipeline_mode<synchronous>, transform_indices = @transform_7, window_bounds = array<i64: 1, 32>}, {pipeline_mode = #tpu.pipeline_mode<synchronous>, transform_indices = @transform_8, window_bounds = array<i64: 32, 32>}, {pipeline_mode = #tpu.pipeline_mode<synchronous>, transform_indices = @transform_9, window_bounds = array<i64: 1, 32>}, {pipeline_mode = #tpu.pipeline_mode<synchronous>, transform_indices = @transform_10, window_bounds = array<i64: 64, 32>}, {pipeline_mode = #tpu.pipeline_mode<synchronous>, transform_indices = @transform_11, window_bounds = array<i64: 1, 32>}, {pipeline_mode = #tpu.pipeline_mode<synchronous>, transform_indices = @transform_12, window_bounds = array<i64: 1, 32>}, {pipeline_mode = #tpu.pipeline_mode<synchronous>, transform_indices = @transform_13, window_bounds = array<i64: 32, 64>}, {pipeline_mode = #tpu.pipeline_mode<synchronous>, transform_indices = @transform_14, window_bounds = array<i64: 1, 64>}, {pipeline_mode = #tpu.pipeline_mode<synchronous>, transform_indices = @transform_15, window_bounds = array<i64: 32, 64>}, {pipeline_mode = #tpu.pipeline_mode<synchronous>, transform_indices = @transform_16, window_bounds = array<i64: 1, 64>}, {pipeline_mode = #tpu.pipeline_mode<synchronous>, transform_indices = @transform_17, window_bounds = array<i64: 64, 32>}, {pipeline_mode = #tpu.pipeline_mode<synchronous>, transform_indices = @transform_18, window_bounds = array<i64: 1, 32>}, {transform_indices = @transform_19, window_bounds = array<i64: 1, 8, 32>}]} {
    %c0 = arith.constant 0 : index
    %c0_0 = arith.constant 0 : index
    %c0_1 = arith.constant 0 : index
    %0 = vector.load %arg1[%c0, %c0_0, %c0_1] : memref<1x8x32xf32, #tpu.memory_space<vmem>>, vector<1x8x32xf32>
    %1 = vector.shape_cast %0 : vector<1x8x32xf32> to vector<8x32xf32>
    %c0_2 = arith.constant 0 : index
    %c0_3 = arith.constant 0 : index
    %2 = vector.load %arg4[%c0_2, %c0_3] : memref<1x32xf32, #tpu.memory_space<vmem>>, vector<1x32xf32>
    %3 = arith.mulf %1, %1 : vector<8x32xf32>
    %cst = arith.constant dense<0.000000e+00> : vector<8xf32>
    %4 = vector.multi_reduction <add>, %3, %cst [1] : vector<8x32xf32> to vector<8xf32>
    %5 = vector.shape_cast %4 : vector<8xf32> to vector<8x1xf32>
    %cst_4 = arith.constant 3.200000e+01 : f32
    %6 = vector.broadcast %cst_4 : f32 to vector<8x1xf32>
    %7 = arith.divf %5, %6 : vector<8x1xf32>
    %8 = math.sqrt %7 : vector<8x1xf32>
    %cst_5 = arith.constant 9.99999997E-7 : f32
    %9 = vector.broadcast %cst_5 : f32 to vector<8x1xf32>
    %10 = arith.addf %8, %9 : vector<8x1xf32>
    %11 = tpu.reciprocal %10 {approx = true} : vector<8x1xf32> -> vector<8x1xf32>
    %12 = vector.broadcast %2 : vector<1x32xf32> to vector<8x32xf32>
    %13 = arith.mulf %12, %1 : vector<8x32xf32>
    %14 = vector.broadcast %11 : vector<8x1xf32> to vector<8x32xf32>
    %15 = arith.mulf %13, %14 : vector<8x32xf32>
    %16 = arith.truncf %15 : vector<8x32xf32> to vector<8x32xbf16>
    %c0_6 = arith.constant 0 : index
    %c0_7 = arith.constant 0 : index
    %17 = vector.load %arg5[%c0_6, %c0_7] : memref<32x64xbf16, #tpu.memory_space<vmem>>, vector<32x64xbf16>
    %cst_8 = arith.constant dense<0.000000e+00> : vector<8x64xf32>
    %18 = tpu.matmul %16, %17, %cst_8 {dimension_numbers = #tpu.dot_dimension_numbers<[1], [0], [0], [1], [0, 0, 1, 1], [], []>} : vector<8x32xbf16>, vector<32x64xbf16>, vector<8x64xf32> -> vector<8x64xf32>
    %c0_9 = arith.constant 0 : index
    %c0_10 = arith.constant 0 : index
    %19 = vector.load %arg6[%c0_9, %c0_10] : memref<1x64xf32, #tpu.memory_space<vmem>>, vector<1x64xf32>
    %20 = vector.broadcast %19 : vector<1x64xf32> to vector<8x64xf32>
    %21 = arith.addf %18, %20 : vector<8x64xf32>
    %c0_11 = arith.constant 0 : index
    %c0_12 = arith.constant 0 : index
    %22 = vector.load %arg7[%c0_11, %c0_12] : memref<32x32xbf16, #tpu.memory_space<vmem>>, vector<32x32xbf16>
    %cst_13 = arith.constant dense<0.000000e+00> : vector<8x32xf32>
    %23 = tpu.matmul %16, %22, %cst_13 {dimension_numbers = #tpu.dot_dimension_numbers<[1], [0], [0], [1], [0, 0, 1, 1], [], []>} : vector<8x32xbf16>, vector<32x32xbf16>, vector<8x32xf32> -> vector<8x32xf32>
    %c0_14 = arith.constant 0 : index
    %c0_15 = arith.constant 0 : index
    %24 = vector.load %arg8[%c0_14, %c0_15] : memref<1x32xf32, #tpu.memory_space<vmem>>, vector<1x32xf32>
    %25 = vector.broadcast %24 : vector<1x32xf32> to vector<8x32xf32>
    %26 = arith.addf %23, %25 : vector<8x32xf32>
    %c0_16 = arith.constant 0 : index
    %c0_17 = arith.constant 0 : index
    %27 = vector.load %arg9[%c0_16, %c0_17] : memref<32x32xbf16, #tpu.memory_space<vmem>>, vector<32x32xbf16>
    %cst_18 = arith.constant dense<0.000000e+00> : vector<8x32xf32>
    %28 = tpu.matmul %16, %27, %cst_18 {dimension_numbers = #tpu.dot_dimension_numbers<[1], [0], [0], [1], [0, 0, 1, 1], [], []>} : vector<8x32xbf16>, vector<32x32xbf16>, vector<8x32xf32> -> vector<8x32xf32>
    %c0_19 = arith.constant 0 : index
    %c0_20 = arith.constant 0 : index
    %29 = vector.load %arg10[%c0_19, %c0_20] : memref<1x32xf32, #tpu.memory_space<vmem>>, vector<1x32xf32>
    %30 = vector.broadcast %29 : vector<1x32xf32> to vector<8x32xf32>
    %31 = arith.addf %28, %30 : vector<8x32xf32>
    %32 = vector.extract_strided_slice %21 {offsets = [0, 0], sizes = [8, 16], strides = [1, 1]} : vector<8x64xf32> to vector<8x16xf32>
    %33 = vector.extract_strided_slice %21 {offsets = [0, 16], sizes = [8, 16], strides = [1, 1]} : vector<8x64xf32> to vector<8x16xf32>
    %34 = vector.extract_strided_slice %21 {offsets = [0, 32], sizes = [8, 16], strides = [1, 1]} : vector<8x64xf32> to vector<8x16xf32>
    %35 = vector.extract_strided_slice %21 {offsets = [0, 48], sizes = [8, 16], strides = [1, 1]} : vector<8x64xf32> to vector<8x16xf32>
    %36 = vector.shape_cast %32 : vector<8x16xf32> to vector<1x8x16xf32>
    %37 = vector.shape_cast %33 : vector<8x16xf32> to vector<1x8x16xf32>
    %38 = vector.shape_cast %34 : vector<8x16xf32> to vector<1x8x16xf32>
    %39 = vector.shape_cast %35 : vector<8x16xf32> to vector<1x8x16xf32>
    %40 = tpu.concatenate %36, %37, %38, %39 in 0 : vector<1x8x16xf32>, vector<1x8x16xf32>, vector<1x8x16xf32>, vector<1x8x16xf32> -> vector<4x8x16xf32>
    %41 = vector.extract_strided_slice %26 {offsets = [0, 0], sizes = [8, 16], strides = [1, 1]} : vector<8x32xf32> to vector<8x16xf32>
    %42 = vector.extract_strided_slice %26 {offsets = [0, 16], sizes = [8, 16], strides = [1, 1]} : vector<8x32xf32> to vector<8x16xf32>
    %43 = vector.shape_cast %41 : vector<8x16xf32> to vector<1x8x16xf32>
    %44 = vector.shape_cast %42 : vector<8x16xf32> to vector<1x8x16xf32>
    %45 = tpu.concatenate %43, %44 in 0 : vector<1x8x16xf32>, vector<1x8x16xf32> -> vector<2x8x16xf32>
    %46 = vector.extract_strided_slice %31 {offsets = [0, 0], sizes = [8, 16], strides = [1, 1]} : vector<8x32xf32> to vector<8x16xf32>
    %47 = vector.extract_strided_slice %31 {offsets = [0, 16], sizes = [8, 16], strides = [1, 1]} : vector<8x32xf32> to vector<8x16xf32>
    %48 = vector.shape_cast %46 : vector<8x16xf32> to vector<1x8x16xf32>
    %49 = vector.shape_cast %47 : vector<8x16xf32> to vector<1x8x16xf32>
    %50 = tpu.concatenate %48, %49 in 0 : vector<1x8x16xf32>, vector<1x8x16xf32> -> vector<2x8x16xf32>
    %c0_21 = arith.constant 0 : index
    %c0_22 = arith.constant 0 : index
    %51 = vector.load %arg2[%c0_21, %c0_22] : memref<8x16xf32, #tpu.memory_space<vmem>>, vector<8x16xf32>
    %52 = vector.shape_cast %51 : vector<8x16xf32> to vector<1x8x16xf32>
    %c0_23 = arith.constant 0 : index
    %c0_24 = arith.constant 0 : index
    %53 = vector.load %arg3[%c0_23, %c0_24] : memref<8x16xf32, #tpu.memory_space<vmem>>, vector<8x16xf32>
    %54 = vector.shape_cast %53 : vector<8x16xf32> to vector<1x8x16xf32>
    %55 = vector.extract_strided_slice %40 {offsets = [0, 0, 8], sizes = [4, 8, 8], strides = [1, 1, 1]} : vector<4x8x16xf32> to vector<4x8x8xf32>
    %56 = vector.extract_strided_slice %40 {offsets = [0, 0, 0], sizes = [4, 8, 8], strides = [1, 1, 1]} : vector<4x8x16xf32> to vector<4x8x8xf32>
    %57 = tpu.concatenate %55, %56 in 2 : vector<4x8x8xf32>, vector<4x8x8xf32> -> vector<4x8x16xf32>
    %58 = vector.broadcast %52 : vector<1x8x16xf32> to vector<4x8x16xf32>
    %59 = arith.mulf %40, %58 : vector<4x8x16xf32>
    %60 = vector.broadcast %54 : vector<1x8x16xf32> to vector<4x8x16xf32>
    %61 = arith.mulf %57, %60 : vector<4x8x16xf32>
    %62 = arith.addf %59, %61 : vector<4x8x16xf32>
    %63 = vector.extract_strided_slice %45 {offsets = [0, 0, 8], sizes = [2, 8, 8], strides = [1, 1, 1]} : vector<2x8x16xf32> to vector<2x8x8xf32>
    %64 = vector.extract_strided_slice %45 {offsets = [0, 0, 0], sizes = [2, 8, 8], strides = [1, 1, 1]} : vector<2x8x16xf32> to vector<2x8x8xf32>
    %65 = tpu.concatenate %63, %64 in 2 : vector<2x8x8xf32>, vector<2x8x8xf32> -> vector<2x8x16xf32>
    %66 = vector.broadcast %52 : vector<1x8x16xf32> to vector<2x8x16xf32>
    %67 = arith.mulf %45, %66 : vector<2x8x16xf32>
    %68 = vector.broadcast %54 : vector<1x8x16xf32> to vector<2x8x16xf32>
    %69 = arith.mulf %65, %68 : vector<2x8x16xf32>
    %70 = arith.addf %67, %69 : vector<2x8x16xf32>
    %71 = tpu.concatenate %70, %70 in 0 : vector<2x8x16xf32>, vector<2x8x16xf32> -> vector<4x8x16xf32>
    %72 = tpu.concatenate %50, %50 in 0 : vector<2x8x16xf32>, vector<2x8x16xf32> -> vector<4x8x16xf32>
    %73 = arith.truncf %62 : vector<4x8x16xf32> to vector<4x8x16xbf16>
    %74 = arith.truncf %71 : vector<4x8x16xf32> to vector<4x8x16xbf16>
    "tpu.trace_start"() <{level = 10 : i32, message = "hqd,hkd->hqk"}> : () -> ()
    %cst_25 = arith.constant dense<0.000000e+00> : vector<4x8x8xf32>
    %75 = tpu.matmul %73, %74, %cst_25 {dimension_numbers = #tpu.dot_dimension_numbers<[2], [2], [1], [1], [0, 0, 0, 1, 1, 1], [0], [0]>} : vector<4x8x16xbf16>, vector<4x8x16xbf16>, vector<4x8x8xf32> -> vector<4x8x8xf32>
    "tpu.trace_stop"() : () -> ()
    %cst_26 = arith.constant 2.500000e-01 : f32
    %76 = vector.broadcast %cst_26 : f32 to vector<4x8x8xf32>
    %77 = arith.mulf %75, %76 : vector<4x8x8xf32>
    %78 = tpu.iota {dimensions = array<i32: 0>} : vector<8x8xi32>
    %79 = tpu.iota {dimensions = array<i32: 1>} : vector<8x8xi32>
    %80 = arith.cmpi sle, %79, %78 : vector<8x8xi32>
    %81 = vector.shape_cast %80 : vector<8x8xi1> to vector<1x8x8xi1>
    %cst_27 = arith.constant -1.000000e+30 : f32
    %82 = vector.shape_cast %81 : vector<1x8x8xi1> to vector<1x8x8xi1>
    %83 = vector.broadcast %82 : vector<1x8x8xi1> to vector<4x8x8xi1>
    %84 = vector.broadcast %cst_27 : f32 to vector<4x8x8xf32>
    %85 = arith.select %83, %77, %84 : vector<4x8x8xi1>, vector<4x8x8xf32>
    %cst_28 = arith.constant dense<0xFF800000> : vector<4x8xf32>
    %86 = vector.multi_reduction <maximumf>, %85, %cst_28 [2] : vector<4x8x8xf32> to vector<4x8xf32>
    %87 = vector.shape_cast %86 : vector<4x8xf32> to vector<4x8x1xf32>
    %88 = vector.broadcast %87 : vector<4x8x1xf32> to vector<4x8x8xf32>
    %89 = arith.subf %85, %88 : vector<4x8x8xf32>
    %90 = math.exp %89 : vector<4x8x8xf32>
    %cst_29 = arith.constant dense<0.000000e+00> : vector<4x8xf32>
    %91 = vector.multi_reduction <add>, %90, %cst_29 [2] : vector<4x8x8xf32> to vector<4x8xf32>
    %92 = vector.shape_cast %91 : vector<4x8xf32> to vector<4x8x1xf32>
    %93 = tpu.reciprocal %92 {approx = true} : vector<4x8x1xf32> -> vector<4x8x1xf32>
    %94 = vector.broadcast %93 : vector<4x8x1xf32> to vector<4x8x8xf32>
    %95 = arith.mulf %90, %94 : vector<4x8x8xf32>
    %96 = arith.truncf %95 : vector<4x8x8xf32> to vector<4x8x8xbf16>
    %97 = arith.truncf %72 : vector<4x8x16xf32> to vector<4x8x16xbf16>
    "tpu.trace_start"() <{level = 10 : i32, message = "hqk,hkd->hqd"}> : () -> ()
    %cst_30 = arith.constant dense<0.000000e+00> : vector<4x8x16xf32>
    %98 = tpu.matmul %96, %97, %cst_30 {dimension_numbers = #tpu.dot_dimension_numbers<[2], [1], [1], [2], [0, 0, 0, 1, 1, 2], [0], [0]>} : vector<4x8x8xbf16>, vector<4x8x16xbf16>, vector<4x8x16xf32> -> vector<4x8x16xf32>
    "tpu.trace_stop"() : () -> ()
    %99 = vector.extract_strided_slice %98 {offsets = [0, 0, 0], sizes = [1, 8, 16], strides = [1, 1, 1]} : vector<4x8x16xf32> to vector<1x8x16xf32>
    %100 = vector.shape_cast %99 : vector<1x8x16xf32> to vector<8x16xf32>
    %101 = vector.extract_strided_slice %98 {offsets = [1, 0, 0], sizes = [1, 8, 16], strides = [1, 1, 1]} : vector<4x8x16xf32> to vector<1x8x16xf32>
    %102 = vector.shape_cast %101 : vector<1x8x16xf32> to vector<8x16xf32>
    %103 = vector.extract_strided_slice %98 {offsets = [2, 0, 0], sizes = [1, 8, 16], strides = [1, 1, 1]} : vector<4x8x16xf32> to vector<1x8x16xf32>
    %104 = vector.shape_cast %103 : vector<1x8x16xf32> to vector<8x16xf32>
    %105 = vector.extract_strided_slice %98 {offsets = [3, 0, 0], sizes = [1, 8, 16], strides = [1, 1, 1]} : vector<4x8x16xf32> to vector<1x8x16xf32>
    %106 = vector.shape_cast %105 : vector<1x8x16xf32> to vector<8x16xf32>
    %107 = tpu.concatenate %100, %102, %104, %106 in 1 : vector<8x16xf32>, vector<8x16xf32>, vector<8x16xf32>, vector<8x16xf32> -> vector<8x64xf32>
    %108 = arith.truncf %107 : vector<8x64xf32> to vector<8x64xbf16>
    %c0_31 = arith.constant 0 : index
    %c0_32 = arith.constant 0 : index
    %109 = vector.load %arg11[%c0_31, %c0_32] : memref<64x32xbf16, #tpu.memory_space<vmem>>, vector<64x32xbf16>
    %cst_33 = arith.constant dense<0.000000e+00> : vector<8x32xf32>
    %110 = tpu.matmul %108, %109, %cst_33 {dimension_numbers = #tpu.dot_dimension_numbers<[1], [0], [0], [1], [0, 0, 1, 1], [], []>} : vector<8x64xbf16>, vector<64x32xbf16>, vector<8x32xf32> -> vector<8x32xf32>
    %c0_34 = arith.constant 0 : index
    %c0_35 = arith.constant 0 : index
    %111 = vector.load %arg12[%c0_34, %c0_35] : memref<1x32xf32, #tpu.memory_space<vmem>>, vector<1x32xf32>
    %112 = vector.broadcast %111 : vector<1x32xf32> to vector<8x32xf32>
    %113 = arith.addf %110, %112 : vector<8x32xf32>
    %114 = arith.addf %1, %113 : vector<8x32xf32>
    %c0_36 = arith.constant 0 : index
    %c0_37 = arith.constant 0 : index
    %115 = vector.load %arg13[%c0_36, %c0_37] : memref<1x32xf32, #tpu.memory_space<vmem>>, vector<1x32xf32>
    %116 = arith.mulf %114, %114 : vector<8x32xf32>
    %cst_38 = arith.constant dense<0.000000e+00> : vector<8xf32>
    %117 = vector.multi_reduction <add>, %116, %cst_38 [1] : vector<8x32xf32> to vector<8xf32>
    %118 = vector.shape_cast %117 : vector<8xf32> to vector<8x1xf32>
    %cst_39 = arith.constant 3.200000e+01 : f32
    %119 = vector.broadcast %cst_39 : f32 to vector<8x1xf32>
    %120 = arith.divf %118, %119 : vector<8x1xf32>
    %121 = math.sqrt %120 : vector<8x1xf32>
    %cst_40 = arith.constant 9.99999997E-7 : f32
    %122 = vector.broadcast %cst_40 : f32 to vector<8x1xf32>
    %123 = arith.addf %121, %122 : vector<8x1xf32>
    %124 = tpu.reciprocal %123 {approx = true} : vector<8x1xf32> -> vector<8x1xf32>
    %125 = vector.broadcast %115 : vector<1x32xf32> to vector<8x32xf32>
    %126 = arith.mulf %125, %114 : vector<8x32xf32>
    %127 = vector.broadcast %124 : vector<8x1xf32> to vector<8x32xf32>
    %128 = arith.mulf %126, %127 : vector<8x32xf32>
    %129 = arith.truncf %128 : vector<8x32xf32> to vector<8x32xbf16>
    %c0_41 = arith.constant 0 : index
    %c0_42 = arith.constant 0 : index
    %130 = vector.load %arg14[%c0_41, %c0_42] : memref<32x64xbf16, #tpu.memory_space<vmem>>, vector<32x64xbf16>
    %cst_43 = arith.constant dense<0.000000e+00> : vector<8x64xf32>
    %131 = tpu.matmul %129, %130, %cst_43 {dimension_numbers = #tpu.dot_dimension_numbers<[1], [0], [0], [1], [0, 0, 1, 1], [], []>} : vector<8x32xbf16>, vector<32x64xbf16>, vector<8x64xf32> -> vector<8x64xf32>
    %c0_44 = arith.constant 0 : index
    %c0_45 = arith.constant 0 : index
    %132 = vector.load %arg15[%c0_44, %c0_45] : memref<1x64xf32, #tpu.memory_space<vmem>>, vector<1x64xf32>
    %133 = vector.broadcast %132 : vector<1x64xf32> to vector<8x64xf32>
    %134 = arith.addf %131, %133 : vector<8x64xf32>
    %c0_46 = arith.constant 0 : index
    %c0_47 = arith.constant 0 : index
    %135 = vector.load %arg16[%c0_46, %c0_47] : memref<32x64xbf16, #tpu.memory_space<vmem>>, vector<32x64xbf16>
    %cst_48 = arith.constant dense<0.000000e+00> : vector<8x64xf32>
    %136 = tpu.matmul %129, %135, %cst_48 {dimension_numbers = #tpu.dot_dimension_numbers<[1], [0], [0], [1], [0, 0, 1, 1], [], []>} : vector<8x32xbf16>, vector<32x64xbf16>, vector<8x64xf32> -> vector<8x64xf32>
    %c0_49 = arith.constant 0 : index
    %c0_50 = arith.constant 0 : index
    %137 = vector.load %arg17[%c0_49, %c0_50] : memref<1x64xf32, #tpu.memory_space<vmem>>, vector<1x64xf32>
    %138 = vector.broadcast %137 : vector<1x64xf32> to vector<8x64xf32>
    %139 = arith.addf %136, %138 : vector<8x64xf32>
    %140 = arith.negf %139 : vector<8x64xf32>
    %141 = math.exp %140 : vector<8x64xf32>
    %cst_51 = arith.constant 1.000000e+00 : f32
    %142 = vector.broadcast %cst_51 : f32 to vector<8x64xf32>
    %143 = arith.addf %142, %141 : vector<8x64xf32>
    %144 = arith.divf %142, %143 : vector<8x64xf32>
    %145 = arith.mulf %139, %144 : vector<8x64xf32>
    %146 = arith.mulf %134, %145 : vector<8x64xf32>
    %147 = arith.truncf %146 : vector<8x64xf32> to vector<8x64xbf16>
    %c0_52 = arith.constant 0 : index
    %c0_53 = arith.constant 0 : index
    %148 = vector.load %arg18[%c0_52, %c0_53] : memref<64x32xbf16, #tpu.memory_space<vmem>>, vector<64x32xbf16>
    %cst_54 = arith.constant dense<0.000000e+00> : vector<8x32xf32>
    %149 = tpu.matmul %147, %148, %cst_54 {dimension_numbers = #tpu.dot_dimension_numbers<[1], [0], [0], [1], [0, 0, 1, 1], [], []>} : vector<8x64xbf16>, vector<64x32xbf16>, vector<8x32xf32> -> vector<8x32xf32>
    %c0_55 = arith.constant 0 : index
    %c0_56 = arith.constant 0 : index
    %150 = vector.load %arg19[%c0_55, %c0_56] : memref<1x32xf32, #tpu.memory_space<vmem>>, vector<1x32xf32>
    %151 = vector.broadcast %150 : vector<1x32xf32> to vector<8x32xf32>
    %152 = arith.addf %149, %151 : vector<8x32xf32>
    %153 = arith.addf %114, %152 : vector<8x32xf32>
    %c0_57 = arith.constant 0 : index
    %c0_58 = arith.constant 0 : index
    %c0_59 = arith.constant 0 : index
    %154 = vector.load %arg20[%c0_57, %c0_58, %c0_59] : memref<1x8x32xf32, #tpu.memory_space<vmem>>, vector<1x8x32xf32>
    %155 = vector.shape_cast %154 : vector<1x8x32xf32> to vector<8x32xf32>
    %156 = vector.shape_cast %153 : vector<8x32xf32> to vector<1x8x32xf32>
    tpu.vector_store %arg20[%c0_57, %c0_58, %c0_59], %156 {strides = array<i32>} : memref<1x8x32xf32, #tpu.memory_space<vmem>>, vector<1x8x32xf32>,
    return
  }
  func.func @transform_0(%arg0: i32) -> (i32, i32, i32) {
    %c0_i32 = arith.constant 0 : i32
    %c0_i32_0 = arith.constant 0 : i32
    %c0_i32_1 = arith.constant 0 : i32
    return %arg0, %c0_i32, %c0_i32_0 : i32, i32, i32
  }
  func.func @transform_1(%arg0: i32) -> (i32, i32) {
    %c0_i32 = arith.constant 0 : i32
    %c0_i32_0 = arith.constant 0 : i32
    %c0_i32_1 = arith.constant 0 : i32
    return %c0_i32, %c0_i32_0 : i32, i32
  }
  func.func @transform_2(%arg0: i32) -> (i32, i32) {
    %c0_i32 = arith.constant 0 : i32
    %c0_i32_0 = arith.constant 0 : i32
    %c0_i32_1 = arith.constant 0 : i32
    return %c0_i32, %c0_i32_0 : i32, i32
  }
  func.func @transform_3(%arg0: i32) -> (i32, i32) {
    %c0_i32 = arith.constant 0 : i32
    %c0_i32_0 = arith.constant 0 : i32
    %c0_i32_1 = arith.constant 0 : i32
    return %c0_i32, %c0_i32_0 : i32, i32
  }
  func.func @transform_4(%arg0: i32) -> (i32, i32) {
    %c0_i32 = arith.constant 0 : i32
    %c0_i32_0 = arith.constant 0 : i32
    %c0_i32_1 = arith.constant 0 : i32
    return %c0_i32, %c0_i32_0 : i32, i32
  }
  func.func @transform_5(%arg0: i32) -> (i32, i32) {
    %c0_i32 = arith.constant 0 : i32
    %c0_i32_0 = arith.constant 0 : i32
    %c0_i32_1 = arith.constant 0 : i32
    return %c0_i32, %c0_i32_0 : i32, i32
  }
  func.func @transform_6(%arg0: i32) -> (i32, i32) {
    %c0_i32 = arith.constant 0 : i32
    %c0_i32_0 = arith.constant 0 : i32
    %c0_i32_1 = arith.constant 0 : i32
    return %c0_i32, %c0_i32_0 : i32, i32
  }
  func.func @transform_7(%arg0: i32) -> (i32, i32) {
    %c0_i32 = arith.constant 0 : i32
    %c0_i32_0 = arith.constant 0 : i32
    %c0_i32_1 = arith.constant 0 : i32
    return %c0_i32, %c0_i32_0 : i32, i32
  }
  func.func @transform_8(%arg0: i32) -> (i32, i32) {
    %c0_i32 = arith.constant 0 : i32
    %c0_i32_0 = arith.constant 0 : i32
    %c0_i32_1 = arith.constant 0 : i32
    return %c0_i32, %c0_i32_0 : i32, i32
  }
  func.func @transform_9(%arg0: i32) -> (i32, i32) {
    %c0_i32 = arith.constant 0 : i32
    %c0_i32_0 = arith.constant 0 : i32
    %c0_i32_1 = arith.constant 0 : i32
    return %c0_i32, %c0_i32_0 : i32, i32
  }
  func.func @transform_10(%arg0: i32) -> (i32, i32) {
    %c0_i32 = arith.constant 0 : i32
    %c0_i32_0 = arith.constant 0 : i32
    %c0_i32_1 = arith.constant 0 : i32
    return %c0_i32, %c0_i32_0 : i32, i32
  }
  func.func @transform_11(%arg0: i32) -> (i32, i32) {
    %c0_i32 = arith.constant 0 : i32
    %c0_i32_0 = arith.constant 0 : i32
    %c0_i32_1 = arith.constant 0 : i32
    return %c0_i32, %c0_i32_0 : i32, i32
  }
  func.func @transform_12(%arg0: i32) -> (i32, i32) {
    %c0_i32 = arith.constant 0 : i32
    %c0_i32_0 = arith.constant 0 : i32
    %c0_i32_1 = arith.constant 0 : i32
    return %c0_i32, %c0_i32_0 : i32, i32
  }
  func.func @transform_13(%arg0: i32) -> (i32, i32) {
    %c0_i32 = arith.constant 0 : i32
    %c0_i32_0 = arith.constant 0 : i32
    %c0_i32_1 = arith.constant 0 : i32
    return %c0_i32, %c0_i32_0 : i32, i32
  }
  func.func @transform_14(%arg0: i32) -> (i32, i32) {
    %c0_i32 = arith.constant 0 : i32
    %c0_i32_0 = arith.constant 0 : i32
    %c0_i32_1 = arith.constant 0 : i32
    return %c0_i32, %c0_i32_0 : i32, i32
  }
  func.func @transform_15(%arg0: i32) -> (i32, i32) {
    %c0_i32 = arith.constant 0 : i32
    %c0_i32_0 = arith.constant 0 : i32
    %c0_i32_1 = arith.constant 0 : i32
    return %c0_i32, %c0_i32_0 : i32, i32
  }
  func.func @transform_16(%arg0: i32) -> (i32, i32) {
    %c0_i32 = arith.constant 0 : i32
    %c0_i32_0 = arith.constant 0 : i32
    %c0_i32_1 = arith.constant 0 : i32
    return %c0_i32, %c0_i32_0 : i32, i32
  }
  func.func @transform_17(%arg0: i32) -> (i32, i32) {
    %c0_i32 = arith.constant 0 : i32
    %c0_i32_0 = arith.constant 0 : i32
    %c0_i32_1 = arith.constant 0 : i32
    return %c0_i32, %c0_i32_0 : i32, i32
  }
  func.func @transform_18(%arg0: i32) -> (i32, i32) {
    %c0_i32 = arith.constant 0 : i32
    %c0_i32_0 = arith.constant 0 : i32
    %c0_i32_1 = arith.constant 0 : i32
    return %c0_i32, %c0_i32_0 : i32, i32
  }
  func.func @transform_19(%arg0: i32) -> (i32, i32, i32) {
    %c0_i32 = arith.constant 0 : i32
    %c0_i32_0 = arith.constant 0 : i32
    %c0_i32_1 = arith.constant 0 : i32
    return %arg0, %c0_i32, %c0_i32_0 : i32, i32, i32
  }
}

</mosaic_0001>

<llo_original>
// kernel: tpu_custom_call.1
$region0: #{tpu_custom_call.1}
  #allocation0 [shape = 'u32[]', space=smem, size = 0x4, offset = 0x4, fixed_abs, tag = 'smem constant byte address 0x4 - core index']
  #allocation1 [shape = 'u32[144,128]{1,0:T(1,128)}', space=vmem, size = 0x12000, scoped, tag = 'internal scratch']
  %s0 = inlined_call_operand.vmem [shape: f32[2,8,32], index: 0, kind: input, shape index: {}]
  %s1 = inlined_call_operand.hbm [shape: f32[8,16], index: 1, kind: input, shape index: {}]
  %s2 = inlined_call_operand.hbm [shape: f32[8,16], index: 2, kind: input, shape index: {}]
  %s3 = inlined_call_operand.vmem [shape: f32[1,32], index: 3, kind: input, shape index: {}]
  %s4 = inlined_call_operand.vmem [shape: bf16[32,64], index: 4, kind: input, shape index: {}]
  %s5 = inlined_call_operand.vmem [shape: f32[1,64], index: 5, kind: input, shape index: {}]
  %s6 = inlined_call_operand.vmem [shape: bf16[32,32], index: 6, kind: input, shape index: {}]
  %s7 = inlined_call_operand.hbm [shape: f32[1,32], index: 7, kind: input, shape index: {}]
  %s8 = inlined_call_operand.vmem [shape: bf16[32,32], index: 8, kind: input, shape index: {}]
  %s9 = inlined_call_operand.hbm [shape: f32[1,32], index: 9, kind: input, shape index: {}]
  %s10 = inlined_call_operand.vmem [shape: bf16[64,32], index: 10, kind: input, shape index: {}]
  %s11 = inlined_call_operand.vmem [shape: f32[1,32], index: 11, kind: input, shape index: {}]
  %s12 = inlined_call_operand.vmem [shape: f32[1,32], index: 12, kind: input, shape index: {}]
  %s13 = inlined_call_operand.vmem [shape: bf16[32,64], index: 13, kind: input, shape index: {}]
  %s14 = inlined_call_operand.vmem [shape: f32[1,64], index: 14, kind: input, shape index: {}]
  %s15 = inlined_call_operand.vmem [shape: bf16[32,64], index: 15, kind: input, shape index: {}]
  %s16 = inlined_call_operand.vmem [shape: f32[1,64], index: 16, kind: input, shape index: {}]
  %s17 = inlined_call_operand.vmem [shape: bf16[64,32], index: 17, kind: input, shape index: {}]
  %s18 = inlined_call_operand.vmem [shape: f32[1,32], index: 18, kind: input, shape index: {}]
  %s19 = inlined_call_operand.hbm [shape: f32[2,8,32], index: 19, kind: output, shape index: {}]
  %s20 = sld [smem:[#allocation0]]
  $region125: #{tpu_custom_call.1} parent=0
    _
  %s22 = ssub.s32 1, %s20
  %s23 = scalar_select 0, %s22, %s20
  $region1: #{tpu_custom_call.1} parent=0
    #allocation2 [shape = 'u8[4096]{0}', space=vmem, size = 0x1000, scoped, tag = 'input window, operand 1, single buffered']
    #allocation3 [shape = 's32[2]{0}', space=sflag, size = 0x8, scoped, tag = 'scoped memory for tpu_custom_call.1']
    #allocation4 [shape = 's32[2]{0}', space=sflag, size = 0x8, scoped, tag = 'scoped memory for tpu_custom_call.1']
    #allocation5 [shape = 'u8[4096]{0}', space=vmem, size = 0x1000, scoped, tag = 'input window, operand 2, single buffered']
    #allocation6 [shape = 's32[1]{0}', space=sflag, size = 0x4, scoped, tag = 'scoped memory for tpu_custom_call.1']
    #allocation7 [shape = 'u8[512]{0}', space=vmem, size = 0x400, scoped, tag = 'input window, operand 7, single buffered']
    #allocation8 [shape = 'u8[512]{0}', space=vmem, size = 0x400, scoped, tag = 'input window, operand 9, single buffered']
    #allocation9 [shape = 's32[1]{0}', space=sflag, size = 0x4, scoped, tag = 'scoped memory for tpu_custom_call.1']
    #allocation10 [shape = 'u8[8192]{0}', space=vmem, size = 0x2000, scoped, tag = 'output window, operand 0']
    %24 = vsyncpa [#allocation3], 0
    %25 = vsyncpa [#allocation6], 0
    %26 = vsyncpa [#allocation9], 0
    %27 = vsyncpa [#allocation4], 0
    %s28 = scalar_lea.sflag [#allocation4], 1
    %29 = vsyncpa %s28, 0
    loop: start=0, step=1, limit=4
    $region2: #{tpu_custom_call.1} parent=1 // loop_pre_header
      _
    $region3: #{tpu_custom_call.1} parent=1 // loop_header
      %s31 = sphi 0, %s35
      %p32 = scmp.ge.s32.totalorder %s31, 4
      %s41 = sphi 0, %s43
      %s44 = sphi 0, %s41
      %s45 = sphi 0, %s44
      %s61 = sphi 0, %s45
      %s65 = sphi 0, %s65
      %s67 = sphi 0, %s65
      %s68 = sphi 0, %s67
      %s82 = sphi 0, %s68
      %s86 = sphi 0, %s86
      %s88 = sphi 0, %s86
      %s89 = sphi 0, %s88
      %s103 = sphi 0, %s89
      %s107 = sphi 0, %s107
      %s109 = sphi 0, %s107
      %s110 = sphi 0, %s109
      %s124 = sphi 0, %s110
      %s128 = sphi 0, %s128
      %s130 = sphi 0, %s128
      %s131 = sphi 0, %s130
      %s145 = sphi 0, %s131
      %s149 = sphi 0, %s149
      %s151 = sphi 0, %s149
      %s152 = sphi 0, %s151
      %s166 = sphi 0, %s152
      %s170 = sphi 0, %s170
      %s172 = sphi 0, %s170
      %s173 = sphi 0, %s172
      %s187 = sphi 0, %s173
      %s191 = sphi 0, %s191
      %s193 = sphi 0, %s191
      %s194 = sphi 0, %s193
      %s208 = sphi 0, %s194
      %s212 = sphi 0, %s212
      %s214 = sphi 0, %s212
      %s215 = sphi 0, %s214
      %s229 = sphi 0, %s215
      %s233 = sphi 0, %s233
      %s235 = sphi 0, %s233
      %s236 = sphi 0, %s235
      %s250 = sphi 0, %s236
      %s254 = sphi 0, %s254
      %s256 = sphi 0, %s254
      %s257 = sphi 0, %s256
      %s271 = sphi 0, %s257
      %s275 = sphi 0, %s275
      %s277 = sphi 0, %s275
      %s278 = sphi 0, %s277
      %s292 = sphi 0, %s278
      %s296 = sphi 0, %s296
      %s298 = sphi 0, %s296
      %s299 = sphi 0, %s298
      %s313 = sphi 0, %s299
      %s317 = sphi 0, %s317
      %s319 = sphi 0, %s317
      %s320 = sphi 0, %s319
      %s334 = sphi 0, %s320
      %s338 = sphi 0, %s338
      %s340 = sphi 0, %s338
      %s341 = sphi 0, %s340
      %s355 = sphi 0, %s341
      %s359 = sphi 0, %s359
      %s361 = sphi 0, %s359
      %s362 = sphi 0, %s361
      %s376 = sphi 0, %s362
      %s380 = sphi 0, %s380
      %s382 = sphi 0, %s380
      %s383 = sphi 0, %s382
      %s397 = sphi 0, %s383
      %s401 = sphi 0, %s401
      %s403 = sphi 0, %s401
      %s404 = sphi 0, %s403
      %s418 = sphi 0, %s404
      %s422 = sphi 0, %s422
      %s424 = sphi 0, %s422
      %s425 = sphi 0, %s424
      %s439 = sphi 0, %s425
      %s445 = sphi 0, %s447
      %s448 = sphi 0, %s445
      %s449 = sphi 0, %s448
      %s465 = sphi 0, %s449
    $region4: #{tpu_custom_call.1} parent=1 // loop_header_branch
      %34 = sbr.rel (%p32) target = $region8
    $region5: #{tpu_custom_call.1} parent=1 // loop_body
      %s36 = ssub.s32 %s31, 1
      %s37 = ssub.s32 %s31, 2
      %s38 = sadd.s32 %s31, 1
      %s39 = ssub.s32 %s31, %s38
      %p40 = scmp.eq.s32.totalorder %s39, 0
      %s42 = sadd.s32 %s41, 1
      %s43 = scalar_select %p40, %s41, %s42
      %p46 = pneg %p40
      %p47 = scmp.eq.s32.totalorder %s31, 1
      %p48 = por %p46, %p47
      %p49 = scmp.ne.s32.totalorder %s41, %s44
      %p50 = scmp.eq.s32.totalorder %s31, 0
      %p51 = por %p49, %p50
      %p52 = scmp.ne.s32.totalorder %s41, %s44
      %p53 = scmp.eq.s32.totalorder %s36, 1
      %p54 = por %p52, %p53
      %p55 = scmp.ne.s32.totalorder %s44, %s45
      %p56 = scmp.eq.s32.totalorder %s36, 0
      %p57 = por %p55, %p56
      %p58 = scmp.ne.s32.totalorder %s44, %s45
      %p59 = scmp.eq.s32.totalorder %s37, 1
      %p60 = por %p58, %p59
      %p62 = scmp.ne.s32.totalorder %s45, %s61
      %p63 = scmp.eq.s32.totalorder %s37, 0
      %p64 = por %p62, %p63
      %s66 = sadd.s32 %s65, 1
      %p69 = scmp.eq.s32.totalorder %s31, 1
      %p70 = scmp.ne.s32.totalorder %s65, %s67
      %p71 = scmp.eq.s32.totalorder %s31, 0
      %p72 = por %p70, %p71
      %p73 = scmp.ne.s32.totalorder %s65, %s67
      %p74 = scmp.eq.s32.totalorder %s36, 1
      %p75 = por %p73, %p74
      %p76 = scmp.ne.s32.totalorder %s67, %s68
      %p77 = scmp.eq.s32.totalorder %s36, 0
      %p78 = por %p76, %p77
      %p79 = scmp.ne.s32.totalorder %s67, %s68
      %p80 = scmp.eq.s32.totalorder %s37, 1
      %p81 = por %p79, %p80
      %p83 = scmp.ne.s32.totalorder %s68, %s82
      %p84 = scmp.eq.s32.totalorder %s37, 0
      %p85 = por %p83, %p84
      %s87 = sadd.s32 %s86, 1
      %p90 = scmp.eq.s32.totalorder %s31, 1
      %p91 = scmp.ne.s32.totalorder %s86, %s88
      %p92 = scmp.eq.s32.totalorder %s31, 0
      %p93 = por %p91, %p92
      %p94 = scmp.ne.s32.totalorder %s86, %s88
      %p95 = scmp.eq.s32.totalorder %s36, 1
      %p96 = por %p94, %p95
      %p97 = scmp.ne.s32.totalorder %s88, %s89
      %p98 = scmp.eq.s32.totalorder %s36, 0
      %p99 = por %p97, %p98
      %p100 = scmp.ne.s32.totalorder %s88, %s89
      %p101 = scmp.eq.s32.totalorder %s37, 1
      %p102 = por %p100, %p101
      %p104 = scmp.ne.s32.totalorder %s89, %s103
      %p105 = scmp.eq.s32.totalorder %s37, 0
      %p106 = por %p104, %p105
      %s108 = sadd.s32 %s107, 1
      %p111 = scmp.eq.s32.totalorder %s31, 1
      %p112 = scmp.ne.s32.totalorder %s107, %s109
      %p113 = scmp.eq.s32.totalorder %s31, 0
      %p114 = por %p112, %p113
      %p115 = scmp.ne.s32.totalorder %s107, %s109
      %p116 = scmp.eq.s32.totalorder %s36, 1
      %p117 = por %p115, %p116
      %p118 = scmp.ne.s32.totalorder %s109, %s110
      %p119 = scmp.eq.s32.totalorder %s36, 0
      %p120 = por %p118, %p119
      %p121 = scmp.ne.s32.totalorder %s109, %s110
      %p122 = scmp.eq.s32.totalorder %s37, 1
      %p123 = por %p121, %p122
      %p125 = scmp.ne.s32.totalorder %s110, %s124
      %p126 = scmp.eq.s32.totalorder %s37, 0
      %p127 = por %p125, %p126
      %s129 = sadd.s32 %s128, 1
      %p132 = scmp.eq.s32.totalorder %s31, 1
      %p133 = scmp.ne.s32.totalorder %s128, %s130
      %p134 = scmp.eq.s32.totalorder %s31, 0
      %p135 = por %p133, %p134
      %p136 = scmp.ne.s32.totalorder %s128, %s130
      %p137 = scmp.eq.s32.totalorder %s36, 1
      %p138 = por %p136, %p137
      %p139 = scmp.ne.s32.totalorder %s130, %s131
      %p140 = scmp.eq.s32.totalorder %s36, 0
      %p141 = por %p139, %p140
      %p142 = scmp.ne.s32.totalorder %s130, %s131
      %p143 = scmp.eq.s32.totalorder %s37, 1
      %p144 = por %p142, %p143
      %p146 = scmp.ne.s32.totalorder %s131, %s145
      %p147 = scmp.eq.s32.totalorder %s37, 0
      %p148 = por %p146, %p147
      %s150 = sadd.s32 %s149, 1
      %p153 = scmp.eq.s32.totalorder %s31, 1
      %p154 = scmp.ne.s32.totalorder %s149, %s151
      %p155 = scmp.eq.s32.totalorder %s31, 0
      %p156 = por %p154, %p155
      %p157 = scmp.ne.s32.totalorder %s149, %s151
      %p158 = scmp.eq.s32.totalorder %s36, 1
      %p159 = por %p157, %p158
      %p160 = scmp.ne.s32.totalorder %s151, %s152
      %p161 = scmp.eq.s32.totalorder %s36, 0
      %p162 = por %p160, %p161
      %p163 = scmp.ne.s32.totalorder %s151, %s152
      %p164 = scmp.eq.s32.totalorder %s37, 1
      %p165 = por %p163, %p164
      %p167 = scmp.ne.s32.totalorder %s152, %s166
      %p168 = scmp.eq.s32.totalorder %s37, 0
      %p169 = por %p167, %p168
      %s171 = sadd.s32 %s170, 1
      %p174 = scmp.eq.s32.totalorder %s31, 1
      %p175 = scmp.ne.s32.totalorder %s170, %s172
      %p176 = scmp.eq.s32.totalorder %s31, 0
      %p177 = por %p175, %p176
      %p178 = scmp.ne.s32.totalorder %s170, %s172
      %p179 = scmp.eq.s32.totalorder %s36, 1
      %p180 = por %p178, %p179
      %p181 = scmp.ne.s32.totalorder %s172, %s173
      %p182 = scmp.eq.s32.totalorder %s36, 0
      %p183 = por %p181, %p182
      %p184 = scmp.ne.s32.totalorder %s172, %s173
      %p185 = scmp.eq.s32.totalorder %s37, 1
      %p186 = por %p184, %p185
      %p188 = scmp.ne.s32.totalorder %s173, %s187
      %p189 = scmp.eq.s32.totalorder %s37, 0
      %p190 = por %p188, %p189
      %s192 = sadd.s32 %s191, 1
      %p195 = scmp.eq.s32.totalorder %s31, 1
      %p196 = scmp.ne.s32.totalorder %s191, %s193
      %p197 = scmp.eq.s32.totalorder %s31, 0
      %p198 = por %p196, %p197
      %p199 = scmp.ne.s32.totalorder %s191, %s193
      %p200 = scmp.eq.s32.totalorder %s36, 1
      %p201 = por %p199, %p200
      %p202 = scmp.ne.s32.totalorder %s193, %s194
      %p203 = scmp.eq.s32.totalorder %s36, 0
      %p204 = por %p202, %p203
      %p205 = scmp.ne.s32.totalorder %s193, %s194
      %p206 = scmp.eq.s32.totalorder %s37, 1
      %p207 = por %p205, %p206
      %p209 = scmp.ne.s32.totalorder %s194, %s208
      %p210 = scmp.eq.s32.totalorder %s37, 0
      %p211 = por %p209, %p210
      %s213 = sadd.s32 %s212, 1
      %p216 = scmp.eq.s32.totalorder %s31, 1
      %p217 = scmp.ne.s32.totalorder %s212, %s214
      %p218 = scmp.eq.s32.totalorder %s31, 0
      %p219 = por %p217, %p218
      %p220 = scmp.ne.s32.totalorder %s212, %s214
      %p221 = scmp.eq.s32.totalorder %s36, 1
      %p222 = por %p220, %p221
      %p223 = scmp.ne.s32.totalorder %s214, %s215
      %p224 = scmp.eq.s32.totalorder %s36, 0
      %p225 = por %p223, %p224
      %p226 = scmp.ne.s32.totalorder %s214, %s215
      %p227 = scmp.eq.s32.totalorder %s37, 1
      %p228 = por %p226, %p227
      %p230 = scmp.ne.s32.totalorder %s215, %s229
      %p231 = scmp.eq.s32.totalorder %s37, 0
      %p232 = por %p230, %p231
      %s234 = sadd.s32 %s233, 1
      %p237 = scmp.eq.s32.totalorder %s31, 1
      %p238 = scmp.ne.s32.totalorder %s233, %s235
      %p239 = scmp.eq.s32.totalorder %s31, 0
      %p240 = por %p238, %p239
      %p241 = scmp.ne.s32.totalorder %s233, %s235
      %p242 = scmp.eq.s32.totalorder %s36, 1
      %p243 = por %p241, %p242
      %p244 = scmp.ne.s32.totalorder %s235, %s236
      %p245 = scmp.eq.s32.totalorder %s36, 0
      %p246 = por %p244, %p245
      %p247 = scmp.ne.s32.totalorder %s235, %s236
      %p248 = scmp.eq.s32.totalorder %s37, 1
      %p249 = por %p247, %p248
      %p251 = scmp.ne.s32.totalorder %s236, %s250
      %p252 = scmp.eq.s32.totalorder %s37, 0
      %p253 = por %p251, %p252
      %s255 = sadd.s32 %s254, 1
      %p258 = scmp.eq.s32.totalorder %s31, 1
      %p259 = scmp.ne.s32.totalorder %s254, %s256
      %p260 = scmp.eq.s32.totalorder %s31, 0
      %p261 = por %p259, %p260
      %p262 = scmp.ne.s32.totalorder %s254, %s256
      %p263 = scmp.eq.s32.totalorder %s36, 1
      %p264 = por %p262, %p263
      %p265 = scmp.ne.s32.totalorder %s256, %s257
      %p266 = scmp.eq.s32.totalorder %s36, 0
      %p267 = por %p265, %p266
      %p268 = scmp.ne.s32.totalorder %s256, %s257
      %p269 = scmp.eq.s32.totalorder %s37, 1
      %p270 = por %p268, %p269
      %p272 = scmp.ne.s32.totalorder %s257, %s271
      %p273 = scmp.eq.s32.totalorder %s37, 0
      %p274 = por %p272, %p273
      %s276 = sadd.s32 %s275, 1
      %p279 = scmp.eq.s32.totalorder %s31, 1
      %p280 = scmp.ne.s32.totalorder %s275, %s277
      %p281 = scmp.eq.s32.totalorder %s31, 0
      %p282 = por %p280, %p281
      %p283 = scmp.ne.s32.totalorder %s275, %s277
      %p284 = scmp.eq.s32.totalorder %s36, 1
      %p285 = por %p283, %p284
      %p286 = scmp.ne.s32.totalorder %s277, %s278
      %p287 = scmp.eq.s32.totalorder %s36, 0
      %p288 = por %p286, %p287
      %p289 = scmp.ne.s32.totalorder %s277, %s278
      %p290 = scmp.eq.s32.totalorder %s37, 1
      %p291 = por %p289, %p290
      %p293 = scmp.ne.s32.totalorder %s278, %s292
      %p294 = scmp.eq.s32.totalorder %s37, 0
      %p295 = por %p293, %p294
      %s297 = sadd.s32 %s296, 1
      %p300 = scmp.eq.s32.totalorder %s31, 1
      %p301 = scmp.ne.s32.totalorder %s296, %s298
      %p302 = scmp.eq.s32.totalorder %s31, 0
      %p303 = por %p301, %p302
      %p304 = scmp.ne.s32.totalorder %s296, %s298
      %p305 = scmp.eq.s32.totalorder %s36, 1
      %p306 = por %p304, %p305
      %p307 = scmp.ne.s32.totalorder %s298, %s299
      %p308 = scmp.eq.s32.totalorder %s36, 0
      %p309 = por %p307, %p308
      %p310 = scmp.ne.s32.totalorder %s298, %s299
      %p311 = scmp.eq.s32.totalorder %s37, 1
      %p312 = por %p310, %p311
      %p314 = scmp.ne.s32.totalorder %s299, %s313
      %p315 = scmp.eq.s32.totalorder %s37, 0
      %p316 = por %p314, %p315
      %s318 = sadd.s32 %s317, 1
      %p321 = scmp.eq.s32.totalorder %s31, 1
      %p322 = scmp.ne.s32.totalorder %s317, %s319
      %p323 = scmp.eq.s32.totalorder %s31, 0
      %p324 = por %p322, %p323
      %p325 = scmp.ne.s32.totalorder %s317, %s319
      %p326 = scmp.eq.s32.totalorder %s36, 1
      %p327 = por %p325, %p326
      %p328 = scmp.ne.s32.totalorder %s319, %s320
      %p329 = scmp.eq.s32.totalorder %s36, 0
      %p330 = por %p328, %p329
      %p331 = scmp.ne.s32.totalorder %s319, %s320
      %p332 = scmp.eq.s32.totalorder %s37, 1
      %p333 = por %p331, %p332
      %p335 = scmp.ne.s32.totalorder %s320, %s334
      %p336 = scmp.eq.s32.totalorder %s37, 0
      %p337 = por %p335, %p336
      %s339 = sadd.s32 %s338, 1
      %p342 = scmp.eq.s32.totalorder %s31, 1
      %p343 = scmp.ne.s32.totalorder %s338, %s340
      %p344 = scmp.eq.s32.totalorder %s31, 0
      %p345 = por %p343, %p344
      %p346 = scmp.ne.s32.totalorder %s338, %s340
      %p347 = scmp.eq.s32.totalorder %s36, 1
      %p348 = por %p346, %p347
      %p349 = scmp.ne.s32.totalorder %s340, %s341
      %p350 = scmp.eq.s32.totalorder %s36, 0
      %p351 = por %p349, %p350
      %p352 = scmp.ne.s32.totalorder %s340, %s341
      %p353 = scmp.eq.s32.totalorder %s37, 1
      %p354 = por %p352, %p353
      %p356 = scmp.ne.s32.totalorder %s341, %s355
      %p357 = scmp.eq.s32.totalorder %s37, 0
      %p358 = por %p356, %p357
      %s360 = sadd.s32 %s359, 1
      %p363 = scmp.eq.s32.totalorder %s31, 1
      %p364 = scmp.ne.s32.totalorder %s359, %s361
      %p365 = scmp.eq.s32.totalorder %s31, 0
      %p366 = por %p364, %p365
      %p367 = scmp.ne.s32.totalorder %s359, %s361
      %p368 = scmp.eq.s32.totalorder %s36, 1
      %p369 = por %p367, %p368
      %p370 = scmp.ne.s32.totalorder %s361, %s362
      %p371 = scmp.eq.s32.totalorder %s36, 0
      %p372 = por %p370, %p371
      %p373 = scmp.ne.s32.totalorder %s361, %s362
      %p374 = scmp.eq.s32.totalorder %s37, 1
      %p375 = por %p373, %p374
      %p377 = scmp.ne.s32.totalorder %s362, %s376
      %p378 = scmp.eq.s32.totalorder %s37, 0
      %p379 = por %p377, %p378
      %s381 = sadd.s32 %s380, 1
      %p384 = scmp.eq.s32.totalorder %s31, 1
      %p385 = scmp.ne.s32.totalorder %s380, %s382
      %p386 = scmp.eq.s32.totalorder %s31, 0
      %p387 = por %p385, %p386
      %p388 = scmp.ne.s32.totalorder %s380, %s382
      %p389 = scmp.eq.s32.totalorder %s36, 1
      %p390 = por %p388, %p389
      %p391 = scmp.ne.s32.totalorder %s382, %s383
      %p392 = scmp.eq.s32.totalorder %s36, 0
      %p393 = por %p391, %p392
      %p394 = scmp.ne.s32.totalorder %s382, %s383
      %p395 = scmp.eq.s32.totalorder %s37, 1
      %p396 = por %p394, %p395
      %p398 = scmp.ne.s32.totalorder %s383, %s397
      %p399 = scmp.eq.s32.totalorder %s37, 0
      %p400 = por %p398, %p399
      %s402 = sadd.s32 %s401, 1
      %p405 = scmp.eq.s32.totalorder %s31, 1
      %p406 = scmp.ne.s32.totalorder %s401, %s403
      %p407 = scmp.eq.s32.totalorder %s31, 0
      %p408 = por %p406, %p407
      %p409 = scmp.ne.s32.totalorder %s401, %s403
      %p410 = scmp.eq.s32.totalorder %s36, 1
      %p411 = por %p409, %p410
      %p412 = scmp.ne.s32.totalorder %s403, %s404
      %p413 = scmp.eq.s32.totalorder %s36, 0
      %p414 = por %p412, %p413
      %p415 = scmp.ne.s32.totalorder %s403, %s404
      %p416 = scmp.eq.s32.totalorder %s37, 1
      %p417 = por %p415, %p416
      %p419 = scmp.ne.s32.totalorder %s404, %s418
      %p420 = scmp.eq.s32.totalorder %s37, 0
      %p421 = por %p419, %p420
      %s423 = sadd.s32 %s422, 1
      %p426 = scmp.eq.s32.totalorder %s31, 1
      %p427 = scmp.ne.s32.totalorder %s422, %s424
      %p428 = scmp.eq.s32.totalorder %s31, 0
      %p429 = por %p427, %p428
      %p430 = scmp.ne.s32.totalorder %s422, %s424
      %p431 = scmp.eq.s32.totalorder %s36, 1
      %p432 = por %p430, %p431
      %p433 = scmp.ne.s32.totalorder %s424, %s425
      %p434 = scmp.eq.s32.totalorder %s36, 0
      %p435 = por %p433, %p434
      %p436 = scmp.ne.s32.totalorder %s424, %s425
      %p437 = scmp.eq.s32.totalorder %s37, 1
      %p438 = por %p436, %p437
      %p440 = scmp.ne.s32.totalorder %s425, %s439
      %p441 = scmp.eq.s32.totalorder %s37, 0
      %p442 = por %p440, %p441
      %s443 = ssub.s32 %s31, %s38
      %p444 = scmp.eq.s32.totalorder %s443, 0
      %s446 = sadd.s32 %s445, 1
      %s447 = scalar_select %p444, %s445, %s446
      %p450 = pneg %p444
      %p451 = scmp.eq.s32.totalorder %s31, 1
      %p452 = por %p450, %p451
      %p453 = scmp.ne.s32.totalorder %s445, %s448
      %p454 = scmp.eq.s32.totalorder %s31, 0
      %p455 = por %p453, %p454
      %p456 = scmp.ne.s32.totalorder %s445, %s448
      %p457 = scmp.eq.s32.totalorder %s36, 1
      %p458 = por %p456, %p457
      %p459 = scmp.ne.s32.totalorder %s448, %s449
      %p460 = scmp.eq.s32.totalorder %s36, 0
      %p461 = por %p459, %p460
      %p462 = scmp.ne.s32.totalorder %s448, %s449
      %p463 = scmp.eq.s32.totalorder %s37, 1
      %p464 = por %p462, %p463
      %p466 = scmp.ne.s32.totalorder %s449, %s465
      %p467 = scmp.eq.s32.totalorder %s37, 0
      %p468 = por %p466, %p467
      %p469 = scmp.le.s32.totalorder 1, %s31
      %p470 = scmp.lt.s32.totalorder %s31, 3
      %p471 = pnand %p469, %p470
      %p472 = pneg %p471
      // Predicated region
      $region9: #{tpu_custom_call.1} parent=5 // pred_check
        _
      $region10: #{tpu_custom_call.1} parent=5 // pred_check_branch
        %474 = sbr.rel (%p471) target = $region12
      $region11: #{tpu_custom_call.1} parent=5 // pred_region
        %s475 = ssub.s32 %s31, 1
        // Predicated region
        $region13: #{tpu_custom_call.1} parent=11 // pred_check
          %p476 = pneg %p78
        $region14: #{tpu_custom_call.1} parent=11 // pred_check_branch
          %478 = sbr.rel (%p476) target = $region16
        $region15: #{tpu_custom_call.1} parent=11 // pred_region
          %s480 = ssub.s32 128, 128
          %481 = vsyncadd [#allocation3], %s480
          %s483 = sshll.u32 [#allocation2], 4
          %s484 = int_to_ptr.vmem [resolvable:$true] %s483
          %486 = dma.hbm_to_vmem [thread:$0]  %s1, 128, %s484, [#allocation3]
        $region16: #{tpu_custom_call.1} parent=11 // pred_fallthru
          _
        // Predicated region
        $region17: #{tpu_custom_call.1} parent=11 // pred_check
          %p487 = pneg %p99
        $region18: #{tpu_custom_call.1} parent=11 // pred_check_branch
          %489 = sbr.rel (%p487) target = $region20
        $region19: #{tpu_custom_call.1} parent=11 // pred_region
          %s491 = ssub.s32 128, 128
          %492 = vsyncadd [#allocation6], %s491
          %s494 = sshll.u32 [#allocation5], 4
          %s495 = int_to_ptr.vmem [resolvable:$true] %s494
          %497 = dma.hbm_to_vmem [thread:$0]  %s2, 128, %s495, [#allocation6]
        $region20: #{tpu_custom_call.1} parent=11 // pred_fallthru
          _
        // Predicated region
        $region21: #{tpu_custom_call.1} parent=11 // pred_check
          %p498 = pneg %p120
        $region22: #{tpu_custom_call.1} parent=11 // pred_check_branch
          %500 = sbr.rel (%p498) target = $region24
        $region23: #{tpu_custom_call.1} parent=11 // pred_region
          _
        $region24: #{tpu_custom_call.1} parent=11 // pred_fallthru
          _
        // Predicated region
        $region25: #{tpu_custom_call.1} parent=11 // pred_check
          %p501 = pneg %p141
        $region26: #{tpu_custom_call.1} parent=11 // pred_check_branch
          %503 = sbr.rel (%p501) target = $region28
        $region27: #{tpu_custom_call.1} parent=11 // pred_region
          _
        $region28: #{tpu_custom_call.1} parent=11 // pred_fallthru
          _
        // Predicated region
        $region29: #{tpu_custom_call.1} parent=11 // pred_check
          %p504 = pneg %p162
        $region30: #{tpu_custom_call.1} parent=11 // pred_check_branch
          %506 = sbr.rel (%p504) target = $region32
        $region31: #{tpu_custom_call.1} parent=11 // pred_region
          _
        $region32: #{tpu_custom_call.1} parent=11 // pred_fallthru
          _
        // Predicated region
        $region33: #{tpu_custom_call.1} parent=11 // pred_check
          %p507 = pneg %p183
        $region34: #{tpu_custom_call.1} parent=11 // pred_check_branch
          %509 = sbr.rel (%p507) target = $region36
        $region35: #{tpu_custom_call.1} parent=11 // pred_region
          _
        $region36: #{tpu_custom_call.1} parent=11 // pred_fallthru
          _
        // Predicated region
        $region37: #{tpu_custom_call.1} parent=11 // pred_check
          %p510 = pneg %p204
        $region38: #{tpu_custom_call.1} parent=11 // pred_check_branch
          %512 = sbr.rel (%p510) target = $region40
        $region39: #{tpu_custom_call.1} parent=11 // pred_region
          %s514 = ssub.s32 16, 16
          %515 = vsyncadd [#allocation6], %s514
          %s517 = sshll.u32 [#allocation7], 4
          %s518 = int_to_ptr.vmem [resolvable:$true] %s517
          %520 = dma.hbm_to_vmem [thread:$0]  %s7, 16, %s518, [#allocation6]
        $region40: #{tpu_custom_call.1} parent=11 // pred_fallthru
          _
        // Predicated region
        $region41: #{tpu_custom_call.1} parent=11 // pred_check
          %p521 = pneg %p225
        $region42: #{tpu_custom_call.1} parent=11 // pred_check_branch
          %523 = sbr.rel (%p521) target = $region44
        $region43: #{tpu_custom_call.1} parent=11 // pred_region
          _
        $region44: #{tpu_custom_call.1} parent=11 // pred_fallthru
          _
        // Predicated region
        $region45: #{tpu_custom_call.1} parent=11 // pred_check
          %p524 = pneg %p246
        $region46: #{tpu_custom_call.1} parent=11 // pred_check_branch
          %526 = sbr.rel (%p524) target = $region48
        $region47: #{tpu_custom_call.1} parent=11 // pred_region
          %s528 = ssub.s32 16, 16
          %529 = vsyncadd [#allocation9], %s528
          %s531 = sshll.u32 [#allocation8], 4
          %s532 = int_to_ptr.vmem [resolvable:$true] %s531
          %534 = dma.hbm_to_vmem [thread:$0]  %s9, 16, %s532, [#allocation9]
        $region48: #{tpu_custom_call.1} parent=11 // pred_fallthru
          _
        // Predicated region
        $region49: #{tpu_custom_call.1} parent=11 // pred_check
          %p535 = pneg %p267
        $region50: #{tpu_custom_call.1} parent=11 // pred_check_branch
          %537 = sbr.rel (%p535) target = $region52
        $region51: #{tpu_custom_call.1} parent=11 // pred_region
          _
        $region52: #{tpu_custom_call.1} parent=11 // pred_fallthru
          _
        // Predicated region
        $region53: #{tpu_custom_call.1} parent=11 // pred_check
          %p538 = pneg %p288
        $region54: #{tpu_custom_call.1} parent=11 // pred_check_branch
          %540 = sbr.rel (%p538) target = $region56
        $region55: #{tpu_custom_call.1} parent=11 // pred_region
          _
        $region56: #{tpu_custom_call.1} parent=11 // pred_fallthru
          _
        // Predicated region
        $region57: #{tpu_custom_call.1} parent=11 // pred_check
          %p541 = pneg %p309
        $region58: #{tpu_custom_call.1} parent=11 // pred_check_branch
          %543 = sbr.rel (%p541) target = $region60
        $region59: #{tpu_custom_call.1} parent=11 // pred_region
          _
        $region60: #{tpu_custom_call.1} parent=11 // pred_fallthru
          _
        // Predicated region
        $region61: #{tpu_custom_call.1} parent=11 // pred_check
          %p544 = pneg %p330
        $region62: #{tpu_custom_call.1} parent=11 // pred_check_branch
          %546 = sbr.rel (%p544) target = $region64
        $region63: #{tpu_custom_call.1} parent=11 // pred_region
          _
        $region64: #{tpu_custom_call.1} parent=11 // pred_fallthru
          _
        // Predicated region
        $region65: #{tpu_custom_call.1} parent=11 // pred_check
          %p547 = pneg %p351
        $region66: #{tpu_custom_call.1} parent=11 // pred_check_branch
          %549 = sbr.rel (%p547) target = $region68
        $region67: #{tpu_custom_call.1} parent=11 // pred_region
          _
        $region68: #{tpu_custom_call.1} parent=11 // pred_fallthru
          _
        // Predicated region
        $region69: #{tpu_custom_call.1} parent=11 // pred_check
          %p550 = pneg %p372
        $region70: #{tpu_custom_call.1} parent=11 // pred_check_branch
          %552 = sbr.rel (%p550) target = $region72
        $region71: #{tpu_custom_call.1} parent=11 // pred_region
          _
        $region72: #{tpu_custom_call.1} parent=11 // pred_fallthru
          _
        // Predicated region
        $region73: #{tpu_custom_call.1} parent=11 // pred_check
          %p553 = pneg %p393
        $region74: #{tpu_custom_call.1} parent=11 // pred_check_branch
          %555 = sbr.rel (%p553) target = $region76
        $region75: #{tpu_custom_call.1} parent=11 // pred_region
          _
        $region76: #{tpu_custom_call.1} parent=11 // pred_fallthru
          _
        // Predicated region
        $region77: #{tpu_custom_call.1} parent=11 // pred_check
          %p556 = pneg %p414
        $region78: #{tpu_custom_call.1} parent=11 // pred_check_branch
          %558 = sbr.rel (%p556) target = $region80
        $region79: #{tpu_custom_call.1} parent=11 // pred_region
          _
        $region80: #{tpu_custom_call.1} parent=11 // pred_fallthru
          _
        // Predicated region
        $region81: #{tpu_custom_call.1} parent=11 // pred_check
          %p559 = pneg %p435
        $region82: #{tpu_custom_call.1} parent=11 // pred_check_branch
          %561 = sbr.rel (%p559) target = $region84
        $region83: #{tpu_custom_call.1} parent=11 // pred_region
          _
        $region84: #{tpu_custom_call.1} parent=11 // pred_fallthru
          _
      $region12: #{tpu_custom_call.1} parent=5 // pred_fallthru
        _
      %p562 = scmp.lt.s32.totalorder %s31, 2
      // Predicated region
      $region85: #{tpu_custom_call.1} parent=5 // pred_check
        %p563 = pneg %p562
      $region86: #{tpu_custom_call.1} parent=5 // pred_check_branch
        %565 = sbr.rel (%p563) target = $region88
      $region87: #{tpu_custom_call.1} parent=5 // pred_region
        // Predicated region
        $region89: #{tpu_custom_call.1} parent=87 // pred_check
          %p566 = pneg %p51
        $region90: #{tpu_custom_call.1} parent=87 // pred_check_branch
          %568 = sbr.rel (%p566) target = $region92
        $region91: #{tpu_custom_call.1} parent=87 // pred_region
          %p569 = scmp.lt.s32.totalorder %s31, 1
          %s570 = scalar_select %p569, %s31, 1
          %s571 = smul.addr %s570, 8
          %s572 = scalar_lea.vmem %s0, %s571
        $region92: #{tpu_custom_call.1} parent=87 // pred_fallthru
          _
      $region88: #{tpu_custom_call.1} parent=5 // pred_fallthru
        _
      %p573 = scmp.le.s32.totalorder 1, %s31
      %p574 = scmp.lt.s32.totalorder %s31, 3
      %p575 = pnand %p573, %p574
      %p576 = pneg %p575
      // Predicated region
      $region93: #{tpu_custom_call.1} parent=5 // pred_check
        _
      $region94: #{tpu_custom_call.1} parent=5 // pred_check_branch
        %578 = sbr.rel (%p575) target = $region96
      $region95: #{tpu_custom_call.1} parent=5 // pred_region
        %s579 = ssub.s32 %s31, 1
        // Predicated region
        $region97: #{tpu_custom_call.1} parent=95 // pred_check
          %p580 = pneg %p78
        $region98: #{tpu_custom_call.1} parent=95 // pred_check_branch
          %582 = sbr.rel (%p580) target = $region100
        $region99: #{tpu_custom_call.1} parent=95 // pred_region
          %583 = dma.done [#allocation3], 128
        $region100: #{tpu_custom_call.1} parent=95 // pred_fallthru
          _
        // Predicated region
        $region101: #{tpu_custom_call.1} parent=95 // pred_check
          %p584 = pneg %p99
        $region102: #{tpu_custom_call.1} parent=95 // pred_check_branch
          %586 = sbr.rel (%p584) target = $region104
        $region103: #{tpu_custom_call.1} parent=95 // pred_region
          %587 = dma.done [#allocation6], 128
        $region104: #{tpu_custom_call.1} parent=95 // pred_fallthru
          _
        // Predicated region
        $region105: #{tpu_custom_call.1} parent=95 // pred_check
          %p588 = pneg %p204
        $region106: #{tpu_custom_call.1} parent=95 // pred_check_branch
          %590 = sbr.rel (%p588) target = $region108
        $region107: #{tpu_custom_call.1} parent=95 // pred_region
          %591 = dma.done [#allocation6], 16
        $region108: #{tpu_custom_call.1} parent=95 // pred_fallthru
          _
        // Predicated region
        $region109: #{tpu_custom_call.1} parent=95 // pred_check
          %p592 = pneg %p246
        $region110: #{tpu_custom_call.1} parent=95 // pred_check_branch
          %594 = sbr.rel (%p592) target = $region112
        $region111: #{tpu_custom_call.1} parent=95 // pred_region
          %595 = dma.done [#allocation9], 16
        $region112: #{tpu_custom_call.1} parent=95 // pred_fallthru
          _
        %p596 = scmp.lt.s32.totalorder %s36, 1
        %s597 = scalar_select %p596, %s36, 1
        %s598 = smul.addr %s597, 8
        %s599 = scalar_lea.vmem %s0, %s598
        %p600 = pneg %p57
        %p601 = pneg %p54
        %p602 = pneg %p78
        %p603 = pneg %p75
        %p604 = pneg %p99
        %p605 = pneg %p96
        %p606 = pneg %p120
        %p607 = pneg %p117
        %p608 = pneg %p141
        %p609 = pneg %p138
        %p610 = pneg %p162
        %p611 = pneg %p159
        %p612 = pneg %p183
        %p613 = pneg %p180
        %p614 = pneg %p204
        %p615 = pneg %p201
        %p616 = pneg %p225
        %p617 = pneg %p222
        %p618 = pneg %p246
        %p619 = pneg %p243
        %p620 = pneg %p267
        %p621 = pneg %p264
        %p622 = pneg %p288
        %p623 = pneg %p285
        %p624 = pneg %p309
        %p625 = pneg %p306
        %p626 = pneg %p330
        %p627 = pneg %p327
        %p628 = pneg %p351
        %p629 = pneg %p348
        %p630 = pneg %p372
        %p631 = pneg %p369
        %p632 = pneg %p393
        %p633 = pneg %p390
        %p634 = pneg %p414
        %p635 = pneg %p411
        %p636 = pneg %p435
        %p637 = pneg %p432
        %p638 = pneg %p461
        %p639 = pneg %p458
        %s640 = sand.u32 %s448, 1
        %s641 = scalar_lea.sflag [#allocation4], %s640
        %s642 = sand.u32 %s448, 1
        %s643 = smul.addr %s642, 8
        %s644 = scalar_lea.vmem [#allocation10], %s643
        %p645 = scmp.lt.s32.totalorder %s36, 1
        %s646 = scalar_select %p645, %s36, 1
        %s647 = smul.addr %s646, 8
        %s648 = scalar_lea.vmem %s0, %s647
        %v650 = vld [vmem:[%s648] sm:$0xff]
        %v651 = vld [vmem:[%s3] sm:$0x1]
        %v652 = vmul.f32 %v650, %v650
        %vm653 = vcmask 261120
        %v654 = vsel %vm653, %v652, 0.0
        %655 = vadd.xlane.f32.xlu0 %v654
        %v656 = vpop.xlane.xlu0 %655
        %v657 = vrcp.pop 32.0
        %v658 = vmul.f32 %v656, %v657
        %v659 = vrsqrt.pop %v658
        %v660 = vmul.f32 %v658, %v659
        %vm661 = vcmp.eq.f32.partialorder %v658, inf
        %v662 = vsel %vm661, %v658, %v660
        %vm663 = vcmp.eq.f32.partialorder %v658, 0.0
        %v664 = vand.u32 %v658, 2147483648
        %v665 = vsel %vm663, %v664, %v662
        %v666 = vadd.f32 %v665, 1e-06
        %v667 = vrcp.pop %v666
        %v669 = vlaneseq
        %v670 = vshrl.u32 %v669, 7
        %v671 = vsub.s32 0, %v670
        %v672 = vrot.slane %v651, %v671
        %v674 = vmul.f32 %v672, %v650
        %v675 = vmul.f32 %v674, %v667
        %v676 = vpack.c.bf16 %v675, %v675
        %v677 = vld [vmem:[%s4] sm:$0xf]
        %v678 = vld [vmem:[%s4 + $0x4] sm:$0xf]
        %v679 = vld [vmem:[%s4 + $0x8] sm:$0xf]
        %v680 = vld [vmem:[%s4 + $0xc] sm:$0xf]
        %v681 = vld [vmem:[%s5] sm:$0x1]
        %v683 = vlaneseq
        %v684 = vshrl.u32 %v683, 7
        %v685 = vsub.s32 0, %v684
        %v686 = vrot.slane %v681, %v685
        %v692 = vunpack.c.l.b16 %v677
        %v693 = vunpack.c.l.b16 %v678
        %v694 = vunpack.c.l.b16 %v679
        %v695 = vunpack.c.l.b16 %v680
        %v696 = vpack.c.b16 %v693, %v692
        %v697 = vpack.c.b16 %v695, %v694
        %v701 = vsel %vm653, %v676, 0
        %703 = vmatprep.subr.bf16.mxu0 0
        %704 = vmatpush1.bf16.msra.mxu0 %v696
        %705 = vmatprep.subr.bf16.mxu0 0
        %706 = vmatpush1.bf16.msra.mxu0 %v697
        %707 = vmatprep.subr.bf16.mxu0 0
        %708 = vmatpush1.bf16.msra.mxu0 0
        %709 = vmatprep.subr.bf16.mxu0 0
        %710 = vmatpush1.bf16.msra.mxu0 0
        %711 = vmatprep.subr.bf16.mxu0 0
        %712 = vmatpush1.bf16.msra.mxu0 0
        %713 = vmatprep.subr.bf16.mxu0 0
        %714 = vmatpush1.bf16.msra.mxu0 0
        %715 = vmatprep.subr.bf16.mxu0 0
        %716 = vmatpush1.bf16.msra.mxu0 0
        %717 = vmatprep.subr.bf16.mxu0 0
        %718 = vmatpush1.bf16.msra.mxu0 0
        %719 = vmatprep.subr.bf16.mxu0 0
        %720 = vmatpush1.bf16.msra.mxu0 0
        %721 = vmatprep.subr.bf16.mxu0 0
        %722 = vmatpush1.bf16.msra.mxu0 0
        %723 = vmatprep.subr.bf16.mxu0 0
        %724 = vmatpush1.bf16.msra.mxu0 0
        %725 = vmatprep.subr.bf16.mxu0 0
        %726 = vmatpush1.bf16.msra.mxu0 0
        %727 = vmatprep.subr.bf16.mxu0 0
        %728 = vmatpush1.bf16.msra.mxu0 0
        %729 = vmatprep.subr.bf16.mxu0 0
        %730 = vmatpush1.bf16.msra.mxu0 0
        %731 = vmatprep.subr.bf16.mxu0 0
        %732 = vmatpush1.bf16.msra.mxu0 0
        %733 = vmatprep.subr.bf16.mxu0 0
        %734 = vmatpush1.bf16.msra.mxu0 0
        %735 = vmatprep.mubr.bf16.mxu0 0
        %736 = vmatmul.mubr.bf16.gmra.mrb[0].mxu0 %v701
        %v737 = vpop.f32.mrb[0].mxu0
        %v738 = vadd.f32 %v686, %v737
        %v739 = vpop.f32.mrb[0].mxu0
        %v740 = vpop.f32.mrb[0].mxu0
        %v741 = vpop.f32.mrb[0].mxu0
        %742 = vdwg.mxu0
        %v743 = vld [vmem:[%s6] sm:$0xf]
        %v744 = vld [vmem:[%s6 + $0x4] sm:$0xf]
        %v745 = vld [vmem:[%s6 + $0x8] sm:$0xf]
        %v746 = vld [vmem:[%s6 + $0xc] sm:$0xf]
        %v747 = vld [vmem:[#allocation7] sm:$0x1]
        %v749 = vlaneseq
        %v750 = vshrl.u32 %v749, 7
        %v751 = vsub.s32 0, %v750
        %v752 = vrot.slane %v747, %v751
        %v758 = vunpack.c.l.b16 %v743
        %v759 = vunpack.c.l.b16 %v744
        %v760 = vunpack.c.l.b16 %v745
        %v761 = vunpack.c.l.b16 %v746
        %v762 = vpack.c.b16 %v759, %v758
        %v763 = vpack.c.b16 %v761, %v760
        %766 = vmatprep.subr.bf16.mxu0 0
        %767 = vmatpush1.bf16.msra.mxu0 %v762
        %768 = vmatprep.subr.bf16.mxu0 0
        %769 = vmatpush1.bf16.msra.mxu0 %v763
        %770 = vmatprep.subr.bf16.mxu0 0
        %771 = vmatpush1.bf16.msra.mxu0 0
        %772 = vmatprep.subr.bf16.mxu0 0
        %773 = vmatpush1.bf16.msra.mxu0 0
        %774 = vmatprep.subr.bf16.mxu0 0
        %775 = vmatpush1.bf16.msra.mxu0 0
        %776 = vmatprep.subr.bf16.mxu0 0
        %777 = vmatpush1.bf16.msra.mxu0 0
        %778 = vmatprep.subr.bf16.mxu0 0
        %779 = vmatpush1.bf16.msra.mxu0 0
        %780 = vmatprep.subr.bf16.mxu0 0
        %781 = vmatpush1.bf16.msra.mxu0 0
        %782 = vmatprep.subr.bf16.mxu0 0
        %783 = vmatpush1.bf16.msra.mxu0 0
        %784 = vmatprep.subr.bf16.mxu0 0
        %785 = vmatpush1.bf16.msra.mxu0 0
        %786 = vmatprep.subr.bf16.mxu0 0
        %787 = vmatpush1.bf16.msra.mxu0 0
        %788 = vmatprep.subr.bf16.mxu0 0
        %789 = vmatpush1.bf16.msra.mxu0 0
        %790 = vmatprep.subr.bf16.mxu0 0
        %791 = vmatpush1.bf16.msra.mxu0 0
        %792 = vmatprep.subr.bf16.mxu0 0
        %793 = vmatpush1.bf16.msra.mxu0 0
        %794 = vmatprep.subr.bf16.mxu0 0
        %795 = vmatpush1.bf16.msra.mxu0 0
        %796 = vmatprep.subr.bf16.mxu0 0
        %797 = vmatpush1.bf16.msra.mxu0 0
        %798 = vmatprep.mubr.bf16.mxu0 0
        %799 = vmatmul.mubr.bf16.gmra.mrb[0].mxu0 %v701
        %v800 = vpop.f32.mrb[0].mxu0
        %v801 = vadd.f32 %v752, %v800
        %v802 = vpop.f32.mrb[0].mxu0
        %v803 = vpop.f32.mrb[0].mxu0
        %v804 = vpop.f32.mrb[0].mxu0
        %805 = vdwg.mxu0
        %v806 = vld [vmem:[%s8] sm:$0xf]
        %v807 = vld [vmem:[%s8 + $0x4] sm:$0xf]
        %v808 = vld [vmem:[%s8 + $0x8] sm:$0xf]
        %v809 = vld [vmem:[%s8 + $0xc] sm:$0xf]
        %v810 = vld [vmem:[#allocation8] sm:$0x1]
        %v812 = vlaneseq
        %v813 = vshrl.u32 %v812, 7
        %v814 = vsub.s32 0, %v813
        %v815 = vrot.slane %v810, %v814
        %v821 = vunpack.c.l.b16 %v806
        %v822 = vunpack.c.l.b16 %v807
        %v823 = vunpack.c.l.b16 %v808
        %v824 = vunpack.c.l.b16 %v809
        %v825 = vpack.c.b16 %v822, %v821
        %v826 = vpack.c.b16 %v824, %v823
        %829 = vmatprep.subr.bf16.mxu0 0
        %830 = vmatpush1.bf16.msra.mxu0 %v825
        %831 = vmatprep.subr.bf16.mxu0 0
        %832 = vmatpush1.bf16.msra.mxu0 %v826
        %833 = vmatprep.subr.bf16.mxu0 0
        %834 = vmatpush1.bf16.msra.mxu0 0
        %835 = vmatprep.subr.bf16.mxu0 0
        %836 = vmatpush1.bf16.msra.mxu0 0
        %837 = vmatprep.subr.bf16.mxu0 0
        %838 = vmatpush1.bf16.msra.mxu0 0
        %839 = vmatprep.subr.bf16.mxu0 0
        %840 = vmatpush1.bf16.msra.mxu0 0
        %841 = vmatprep.subr.bf16.mxu0 0
        %842 = vmatpush1.bf16.msra.mxu0 0
        %843 = vmatprep.subr.bf16.mxu0 0
        %844 = vmatpush1.bf16.msra.mxu0 0
        %845 = vmatprep.subr.bf16.mxu0 0
        %846 = vmatpush1.bf16.msra.mxu0 0
        %847 = vmatprep.subr.bf16.mxu0 0
        %848 = vmatpush1.bf16.msra.mxu0 0
        %849 = vmatprep.subr.bf16.mxu0 0
        %850 = vmatpush1.bf16.msra.mxu0 0
        %851 = vmatprep.subr.bf16.mxu0 0
        %852 = vmatpush1.bf16.msra.mxu0 0
        %853 = vmatprep.subr.bf16.mxu0 0
        %854 = vmatpush1.bf16.msra.mxu0 0
        %855 = vmatprep.subr.bf16.mxu0 0
        %856 = vmatpush1.bf16.msra.mxu0 0
        %857 = vmatprep.subr.bf16.mxu0 0
        %858 = vmatpush1.bf16.msra.mxu0 0
        %859 = vmatprep.subr.bf16.mxu0 0
        %860 = vmatpush1.bf16.msra.mxu0 0
        %861 = vmatprep.mubr.bf16.mxu0 0
        %862 = vmatmul.mubr.bf16.gmra.mrb[0].mxu0 %v701
        %v863 = vpop.f32.mrb[0].mxu0
        %v864 = vadd.f32 %v815, %v863
        %v865 = vpop.f32.mrb[0].mxu0
        %v866 = vpop.f32.mrb[0].mxu0
        %v867 = vpop.f32.mrb[0].mxu0
        %868 = vdwg.mxu0
        %870 = vrot.lane.b32.xlu0 %v738, 112
        %v871 = vpop.permute.xlu0 %870
        %873 = vrot.lane.b32.xlu0 %v738, 96
        %v874 = vpop.permute.xlu0 %873
        %876 = vrot.lane.b32.xlu0 %v738, 80
        %v877 = vpop.permute.xlu0 %876
        %880 = vrot.lane.b32.xlu0 %v801, 112
        %v881 = vpop.permute.xlu0 %880
        %884 = vrot.lane.b32.xlu0 %v864, 112
        %v885 = vpop.permute.xlu0 %884
        %v887 = vld [vmem:[#allocation2] sm:$0xff]
        %v888 = vld [vmem:[#allocation5] sm:$0xff]
        %889 = vrot.lane.b32.xlu0 %v738, 120
        %v890 = vpop.permute.xlu0 %889
        %891 = vrot.lane.b32.xlu0 %v871, 120
        %v892 = vpop.permute.xlu0 %891
        %893 = vrot.lane.b32.xlu0 %v874, 120
        %v894 = vpop.permute.xlu0 %893
        %895 = vrot.lane.b32.xlu0 %v877, 120
        %v896 = vpop.permute.xlu0 %895
        %901 = vrot.lane.b32.xlu0 %v738, 8
        %v902 = vpop.permute.xlu0 %901
        %903 = vrot.lane.b32.xlu0 %v871, 8
        %v904 = vpop.permute.xlu0 %903
        %905 = vrot.lane.b32.xlu0 %v874, 8
        %v906 = vpop.permute.xlu0 %905
        %907 = vrot.lane.b32.xlu0 %v877, 8
        %v908 = vpop.permute.xlu0 %907
        %vm913 = vcmask 64512
        %v914 = vsel %vm913, %v890, %v902
        %v915 = vsel %vm913, %v892, %v904
        %v916 = vsel %vm913, %v894, %v906
        %v917 = vsel %vm913, %v896, %v908
        %v918 = vmul.f32 %v738, %v887
        %v919 = vmul.f32 %v871, %v887
        %v920 = vmul.f32 %v874, %v887
        %v921 = vmul.f32 %v877, %v887
        %v922 = vmul.f32 %v914, %v888
        %v923 = vmul.f32 %v915, %v888
        %v924 = vmul.f32 %v916, %v888
        %v925 = vmul.f32 %v917, %v888
        %v926 = vadd.f32 %v918, %v922
        %v927 = vadd.f32 %v919, %v923
        %v928 = vadd.f32 %v920, %v924
        %v929 = vadd.f32 %v921, %v925
        %930 = vrot.lane.b32.xlu0 %v801, 120
        %v931 = vpop.permute.xlu0 %930
        %932 = vrot.lane.b32.xlu0 %v881, 120
        %v933 = vpop.permute.xlu0 %932
        %936 = vrot.lane.b32.xlu0 %v801, 8
        %v937 = vpop.permute.xlu0 %936
        %938 = vrot.lane.b32.xlu0 %v881, 8
        %v939 = vpop.permute.xlu0 %938
        %v942 = vsel %vm913, %v931, %v937
        %v943 = vsel %vm913, %v933, %v939
        %v944 = vmul.f32 %v801, %v887
        %v945 = vmul.f32 %v881, %v887
        %v946 = vmul.f32 %v942, %v888
        %v947 = vmul.f32 %v943, %v888
        %v948 = vadd.f32 %v944, %v946
        %v949 = vadd.f32 %v945, %v947
        %v950 = vpack.c.bf16 %v926, %v926
        %v951 = vpack.c.bf16 %v927, %v927
        %v952 = vpack.c.bf16 %v928, %v928
        %v953 = vpack.c.bf16 %v929, %v929
        %v954 = vpack.c.bf16 %v948, %v948
        %v955 = vpack.c.bf16 %v949, %v949
        %vm956 = vcmask 130048
        %v958 = vsel %vm956, %v950, 0
        %v961 = vsel %vm956, %v954, 0
        %963 = vmatprep.subr.bf16.mxu0 0
        %964 = vmatpush1.bf16.xpose.msra.mxu0 %v961
        %965 = vmatprep.subr.bf16.mxu0 0
        %966 = vmatpush1.bf16.xpose.msra.mxu0 0
        %967 = vmatprep.subr.bf16.mxu0 0
        %968 = vmatpush1.bf16.xpose.msra.mxu0 0
        %969 = vmatprep.subr.bf16.mxu0 0
        %970 = vmatpush1.bf16.xpose.msra.mxu0 0
        %971 = vmatprep.subr.bf16.mxu0 0
        %972 = vmatpush1.bf16.xpose.msra.mxu0 0
        %973 = vmatprep.subr.bf16.mxu0 0
        %974 = vmatpush1.bf16.xpose.msra.mxu0 0
        %975 = vmatprep.subr.bf16.mxu0 0
        %976 = vmatpush1.bf16.xpose.msra.mxu0 0
        %977 = vmatprep.subr.bf16.mxu0 0
        %978 = vmatpush1.bf16.xpose.msra.mxu0 0
        %979 = vmatprep.subr.bf16.mxu0 0
        %980 = vmatpush1.bf16.xpose.msra.mxu0 0
        %981 = vmatprep.subr.bf16.mxu0 0
        %982 = vmatpush1.bf16.xpose.msra.mxu0 0
        %983 = vmatprep.subr.bf16.mxu0 0
        %984 = vmatpush1.bf16.xpose.msra.mxu0 0
        %985 = vmatprep.subr.bf16.mxu0 0
        %986 = vmatpush1.bf16.xpose.msra.mxu0 0
        %987 = vmatprep.subr.bf16.mxu0 0
        %988 = vmatpush1.bf16.xpose.msra.mxu0 0
        %989 = vmatprep.subr.bf16.mxu0 0
        %990 = vmatpush1.bf16.xpose.msra.mxu0 0
        %991 = vmatprep.subr.bf16.mxu0 0
        %992 = vmatpush1.bf16.xpose.msra.mxu0 0
        %993 = vmatprep.subr.bf16.mxu0 0
        %994 = vmatpush1.bf16.xpose.msra.mxu0 0
        %995 = vmatprep.mubr.bf16.mxu0 0
        %996 = vmatmul.mubr.bf16.gmra.mrb[0].mxu0 %v958
        %v997 = vpop.f32.mrb[0].mxu0
        %v998 = vadd.f32 0.0, %v997
        %v999 = vpop.f32.mrb[0].mxu0
        %v1000 = vpop.f32.mrb[0].mxu0
        %v1001 = vpop.f32.mrb[0].mxu0
        %1002 = vdwg.mxu0
        %v1004 = vsel %vm956, %v951, 0
        %v1007 = vsel %vm956, %v955, 0
        %1009 = vmatprep.subr.bf16.mxu0 0
        %1010 = vmatpush1.bf16.xpose.msra.mxu0 %v1007
        %1011 = vmatprep.subr.bf16.mxu0 0
        %1012 = vmatpush1.bf16.xpose.msra.mxu0 0
        %1013 = vmatprep.subr.bf16.mxu0 0
        %1014 = vmatpush1.bf16.xpose.msra.mxu0 0
        %1015 = vmatprep.subr.bf16.mxu0 0
        %1016 = vmatpush1.bf16.xpose.msra.mxu0 0
        %1017 = vmatprep.subr.bf16.mxu0 0
        %1018 = vmatpush1.bf16.xpose.msra.mxu0 0
        %1019 = vmatprep.subr.bf16.mxu0 0
        %1020 = vmatpush1.bf16.xpose.msra.mxu0 0
        %1021 = vmatprep.subr.bf16.mxu0 0
        %1022 = vmatpush1.bf16.xpose.msra.mxu0 0
        %1023 = vmatprep.subr.bf16.mxu0 0
        %1024 = vmatpush1.bf16.xpose.msra.mxu0 0
        %1025 = vmatprep.subr.bf16.mxu0 0
        %1026 = vmatpush1.bf16.xpose.msra.mxu0 0
        %1027 = vmatprep.subr.bf16.mxu0 0
        %1028 = vmatpush1.bf16.xpose.msra.mxu0 0
        %1029 = vmatprep.subr.bf16.mxu0 0
        %1030 = vmatpush1.bf16.xpose.msra.mxu0 0
        %1031 = vmatprep.subr.bf16.mxu0 0
        %1032 = vmatpush1.bf16.xpose.msra.mxu0 0
        %1033 = vmatprep.subr.bf16.mxu0 0
        %1034 = vmatpush1.bf16.xpose.msra.mxu0 0
        %1035 = vmatprep.subr.bf16.mxu0 0
        %1036 = vmatpush1.bf16.xpose.msra.mxu0 0
        %1037 = vmatprep.subr.bf16.mxu0 0
        %1038 = vmatpush1.bf16.xpose.msra.mxu0 0
        %1039 = vmatprep.subr.bf16.mxu0 0
        %1040 = vmatpush1.bf16.xpose.msra.mxu0 0
        %1041 = vmatprep.mubr.bf16.mxu0 0
        %1042 = vmatmul.mubr.bf16.gmra.mrb[0].mxu0 %v1004
        %v1043 = vpop.f32.mrb[0].mxu0
        %v1044 = vadd.f32 0.0, %v1043
        %v1045 = vpop.f32.mrb[0].mxu0
        %v1046 = vpop.f32.mrb[0].mxu0
        %v1047 = vpop.f32.mrb[0].mxu0
        %1048 = vdwg.mxu0
        %v1050 = vsel %vm956, %v952, 0
        %1052 = vmatprep.subr.bf16.mxu0 0
        %1053 = vmatpush1.bf16.xpose.msra.mxu0 %v961
        %1054 = vmatprep.subr.bf16.mxu0 0
        %1055 = vmatpush1.bf16.xpose.msra.mxu0 0
        %1056 = vmatprep.subr.bf16.mxu0 0
        %1057 = vmatpush1.bf16.xpose.msra.mxu0 0
        %1058 = vmatprep.subr.bf16.mxu0 0
        %1059 = vmatpush1.bf16.xpose.msra.mxu0 0
        %1060 = vmatprep.subr.bf16.mxu0 0
        %1061 = vmatpush1.bf16.xpose.msra.mxu0 0
        %1062 = vmatprep.subr.bf16.mxu0 0
        %1063 = vmatpush1.bf16.xpose.msra.mxu0 0
        %1064 = vmatprep.subr.bf16.mxu0 0
        %1065 = vmatpush1.bf16.xpose.msra.mxu0 0
        %1066 = vmatprep.subr.bf16.mxu0 0
        %1067 = vmatpush1.bf16.xpose.msra.mxu0 0
        %1068 = vmatprep.subr.bf16.mxu0 0
        %1069 = vmatpush1.bf16.xpose.msra.mxu0 0
        %1070 = vmatprep.subr.bf16.mxu0 0
        %1071 = vmatpush1.bf16.xpose.msra.mxu0 0
        %1072 = vmatprep.subr.bf16.mxu0 0
        %1073 = vmatpush1.bf16.xpose.msra.mxu0 0
        %1074 = vmatprep.subr.bf16.mxu0 0
        %1075 = vmatpush1.bf16.xpose.msra.mxu0 0
        %1076 = vmatprep.subr.bf16.mxu0 0
        %1077 = vmatpush1.bf16.xpose.msra.mxu0 0
        %1078 = vmatprep.subr.bf16.mxu0 0
        %1079 = vmatpush1.bf16.xpose.msra.mxu0 0
        %1080 = vmatprep.subr.bf16.mxu0 0
        %1081 = vmatpush1.bf16.xpose.msra.mxu0 0
        %1082 = vmatprep.subr.bf16.mxu0 0
        %1083 = vmatpush1.bf16.xpose.msra.mxu0 0
        %1084 = vmatprep.mubr.bf16.mxu0 0
        %1085 = vmatmul.mubr.bf16.gmra.mrb[0].mxu0 %v1050
        %v1086 = vpop.f32.mrb[0].mxu0
        %v1087 = vadd.f32 0.0, %v1086
        %v1088 = vpop.f32.mrb[0].mxu0
        %v1089 = vpop.f32.mrb[0].mxu0
        %v1090 = vpop.f32.mrb[0].mxu0
        %1091 = vdwg.mxu0
        %v1093 = vsel %vm956, %v953, 0
        %1095 = vmatprep.subr.bf16.mxu0 0
        %1096 = vmatpush1.bf16.xpose.msra.mxu0 %v1007
        %1097 = vmatprep.subr.bf16.mxu0 0
        %1098 = vmatpush1.bf16.xpose.msra.mxu0 0
        %1099 = vmatprep.subr.bf16.mxu0 0
        %1100 = vmatpush1.bf16.xpose.msra.mxu0 0
        %1101 = vmatprep.subr.bf16.mxu0 0
        %1102 = vmatpush1.bf16.xpose.msra.mxu0 0
        %1103 = vmatprep.subr.bf16.mxu0 0
        %1104 = vmatpush1.bf16.xpose.msra.mxu0 0
        %1105 = vmatprep.subr.bf16.mxu0 0
        %1106 = vmatpush1.bf16.xpose.msra.mxu0 0
        %1107 = vmatprep.subr.bf16.mxu0 0
        %1108 = vmatpush1.bf16.xpose.msra.mxu0 0
        %1109 = vmatprep.subr.bf16.mxu0 0
        %1110 = vmatpush1.bf16.xpose.msra.mxu0 0
        %1111 = vmatprep.subr.bf16.mxu0 0
        %1112 = vmatpush1.bf16.xpose.msra.mxu0 0
        %1113 = vmatprep.subr.bf16.mxu0 0
        %1114 = vmatpush1.bf16.xpose.msra.mxu0 0
        %1115 = vmatprep.subr.bf16.mxu0 0
        %1116 = vmatpush1.bf16.xpose.msra.mxu0 0
        %1117 = vmatprep.subr.bf16.mxu0 0
        %1118 = vmatpush1.bf16.xpose.msra.mxu0 0
        %1119 = vmatprep.subr.bf16.mxu0 0
        %1120 = vmatpush1.bf16.xpose.msra.mxu0 0
        %1121 = vmatprep.subr.bf16.mxu0 0
        %1122 = vmatpush1.bf16.xpose.msra.mxu0 0
        %1123 = vmatprep.subr.bf16.mxu0 0
        %1124 = vmatpush1.bf16.xpose.msra.mxu0 0
        %1125 = vmatprep.subr.bf16.mxu0 0
        %1126 = vmatpush1.bf16.xpose.msra.mxu0 0
        %1127 = vmatprep.mubr.bf16.mxu0 0
        %1128 = vmatmul.mubr.bf16.gmra.mrb[0].mxu0 %v1093
        %v1129 = vpop.f32.mrb[0].mxu0
        %v1130 = vadd.f32 0.0, %v1129
        %v1131 = vpop.f32.mrb[0].mxu0
        %v1132 = vpop.f32.mrb[0].mxu0
        %v1133 = vpop.f32.mrb[0].mxu0
        %1134 = vdwg.mxu0
        %v1135 = vmul.f32 %v998, 0.25
        %v1136 = vmul.f32 %v1044, 0.25
        %v1137 = vmul.f32 %v1087, 0.25
        %v1138 = vmul.f32 %v1130, 0.25
        %v1139 = vlaneseq
        %v1140 = vshrl.u32 %v1139, 7
        %v1141 = vlaneseq
        %v1142 = vand.u32 %v1141, 127
        %vm1143 = vcmp.le.s32.totalorder %v1142, %v1140
        %v1144 = vsel %vm1143, 1, 0
        %vm1145 = vcmp.eq.s32.totalorder %v1144, 1
        %v1146 = vsel %vm1145, %v1135, -1e+30
        %v1147 = vsel %vm1145, %v1136, -1e+30
        %v1148 = vsel %vm1145, %v1137, -1e+30
        %v1149 = vsel %vm1145, %v1138, -1e+30
        %v1150 = vsel %vm913, %v1146, -inf
        %1151 = vmax.xlane.f32.xlu0 %v1150
        %v1152 = vpop.xlane.xlu0 %1151
        %v1153 = vsel %vm913, %v1147, -inf
        %1154 = vmax.xlane.f32.xlu0 %v1153
        %v1155 = vpop.xlane.xlu0 %1154
        %v1156 = vsel %vm913, %v1148, -inf
        %1157 = vmax.xlane.f32.xlu0 %v1156
        %v1158 = vpop.xlane.xlu0 %1157
        %v1159 = vsel %vm913, %v1149, -inf
        %1160 = vmax.xlane.f32.xlu0 %v1159
        %v1161 = vpop.xlane.xlu0 %1160
        %v1162 = vsub.f32 %v1146, %v1152
        %v1163 = vsub.f32 %v1147, %v1155
        %v1164 = vsub.f32 %v1148, %v1158
        %v1165 = vsub.f32 %v1149, %v1161
        %v1166 = vmul.f32 %v1162, 1.442695
        %v1167 = vpow.pop %v1166
        %v1168 = vmul.f32 %v1163, 1.442695
        %v1169 = vpow.pop %v1168
        %v1170 = vmul.f32 %v1164, 1.442695
        %v1171 = vpow.pop %v1170
        %v1172 = vmul.f32 %v1165, 1.442695
        %v1173 = vpow.pop %v1172
        %v1174 = vsel %vm913, %v1167, 0.0
        %1175 = vadd.xlane.f32.xlu0 %v1174
        %v1176 = vpop.xlane.xlu0 %1175
        %v1177 = vsel %vm913, %v1169, 0.0
        %1178 = vadd.xlane.f32.xlu0 %v1177
        %v1179 = vpop.xlane.xlu0 %1178
        %v1180 = vsel %vm913, %v1171, 0.0
        %1181 = vadd.xlane.f32.xlu0 %v1180
        %v1182 = vpop.xlane.xlu0 %1181
        %v1183 = vsel %vm913, %v1173, 0.0
        %1184 = vadd.xlane.f32.xlu0 %v1183
        %v1185 = vpop.xlane.xlu0 %1184
        %v1186 = vrcp.pop %v1176
        %v1187 = vrcp.pop %v1179
        %v1188 = vrcp.pop %v1182
        %v1189 = vrcp.pop %v1185
        %v1190 = vmul.f32 %v1167, %v1186
        %v1191 = vmul.f32 %v1169, %v1187
        %v1192 = vmul.f32 %v1171, %v1188
        %v1193 = vmul.f32 %v1173, %v1189
        %v1194 = vpack.c.bf16 %v1190, %v1190
        %v1195 = vpack.c.bf16 %v1191, %v1191
        %v1196 = vpack.c.bf16 %v1192, %v1192
        %v1197 = vpack.c.bf16 %v1193, %v1193
        %v1198 = vpack.c.bf16 %v864, %v864
        %v1199 = vpack.c.bf16 %v885, %v885
        %v1201 = vsel %vm913, %v1194, 0
        %vm1203 = vcmask 1043456
        %v1205 = vsel %vm1203, %v1198, 0
        %1207 = vmatprep.subr.bf16.mxu0 0
        %1208 = vmatpush1.bf16.msra.mxu0 %v1205
        %1209 = vmatprep.subr.bf16.mxu0 0
        %1210 = vmatpush1.bf16.msra.mxu0 0
        %1211 = vmatprep.subr.bf16.mxu0 0
        %1212 = vmatpush1.bf16.msra.mxu0 0
        %1213 = vmatprep.subr.bf16.mxu0 0
        %1214 = vmatpush1.bf16.msra.mxu0 0
        %1215 = vmatprep.subr.bf16.mxu0 0
        %1216 = vmatpush1.bf16.msra.mxu0 0
        %1217 = vmatprep.subr.bf16.mxu0 0
        %1218 = vmatpush1.bf16.msra.mxu0 0
        %1219 = vmatprep.subr.bf16.mxu0 0
        %1220 = vmatpush1.bf16.msra.mxu0 0
        %1221 = vmatprep.subr.bf16.mxu0 0
        %1222 = vmatpush1.bf16.msra.mxu0 0
        %1223 = vmatprep.subr.bf16.mxu0 0
        %1224 = vmatpush1.bf16.msra.mxu0 0
        %1225 = vmatprep.subr.bf16.mxu0 0
        %1226 = vmatpush1.bf16.msra.mxu0 0
        %1227 = vmatprep.subr.bf16.mxu0 0
        %1228 = vmatpush1.bf16.msra.mxu0 0
        %1229 = vmatprep.subr.bf16.mxu0 0
        %1230 = vmatpush1.bf16.msra.mxu0 0
        %1231 = vmatprep.subr.bf16.mxu0 0
        %1232 = vmatpush1.bf16.msra.mxu0 0
        %1233 = vmatprep.subr.bf16.mxu0 0
        %1234 = vmatpush1.bf16.msra.mxu0 0
        %1235 = vmatprep.subr.bf16.mxu0 0
        %1236 = vmatpush1.bf16.msra.mxu0 0
        %1237 = vmatprep.subr.bf16.mxu0 0
        %1238 = vmatpush1.bf16.msra.mxu0 0
        %1239 = vmatprep.mubr.bf16.mxu0 0
        %1240 = vmatmul.mubr.bf16.gmra.mrb[0].mxu0 %v1201
        %v1241 = vpop.f32.mrb[0].mxu0
        %v1242 = vadd.f32 0.0, %v1241
        %v1243 = vpop.f32.mrb[0].mxu0
        %v1244 = vpop.f32.mrb[0].mxu0
        %v1245 = vpop.f32.mrb[0].mxu0
        %1246 = vdwg.mxu0
        %v1248 = vsel %vm913, %v1195, 0
        %v1251 = vsel %vm1203, %v1199, 0
        %1253 = vmatprep.subr.bf16.mxu0 0
        %1254 = vmatpush1.bf16.msra.mxu0 %v1251
        %1255 = vmatprep.subr.bf16.mxu0 0
        %1256 = vmatpush1.bf16.msra.mxu0 0
        %1257 = vmatprep.subr.bf16.mxu0 0
        %1258 = vmatpush1.bf16.msra.mxu0 0
        %1259 = vmatprep.subr.bf16.mxu0 0
        %1260 = vmatpush1.bf16.msra.mxu0 0
        %1261 = vmatprep.subr.bf16.mxu0 0
        %1262 = vmatpush1.bf16.msra.mxu0 0
        %1263 = vmatprep.subr.bf16.mxu0 0
        %1264 = vmatpush1.bf16.msra.mxu0 0
        %1265 = vmatprep.subr.bf16.mxu0 0
        %1266 = vmatpush1.bf16.msra.mxu0 0
        %1267 = vmatprep.subr.bf16.mxu0 0
        %1268 = vmatpush1.bf16.msra.mxu0 0
        %1269 = vmatprep.subr.bf16.mxu0 0
        %1270 = vmatpush1.bf16.msra.mxu0 0
        %1271 = vmatprep.subr.bf16.mxu0 0
        %1272 = vmatpush1.bf16.msra.mxu0 0
        %1273 = vmatprep.subr.bf16.mxu0 0
        %1274 = vmatpush1.bf16.msra.mxu0 0
        %1275 = vmatprep.subr.bf16.mxu0 0
        %1276 = vmatpush1.bf16.msra.mxu0 0
        %1277 = vmatprep.subr.bf16.mxu0 0
        %1278 = vmatpush1.bf16.msra.mxu0 0
        %1279 = vmatprep.subr.bf16.mxu0 0
        %1280 = vmatpush1.bf16.msra.mxu0 0
        %1281 = vmatprep.subr.bf16.mxu0 0
        %1282 = vmatpush1.bf16.msra.mxu0 0
        %1283 = vmatprep.subr.bf16.mxu0 0
        %1284 = vmatpush1.bf16.msra.mxu0 0
        %1285 = vmatprep.mubr.bf16.mxu0 0
        %1286 = vmatmul.mubr.bf16.gmra.mrb[0].mxu0 %v1248
        %v1287 = vpop.f32.mrb[0].mxu0
        %v1288 = vadd.f32 0.0, %v1287
        %v1289 = vpop.f32.mrb[0].mxu0
        %v1290 = vpop.f32.mrb[0].mxu0
        %v1291 = vpop.f32.mrb[0].mxu0
        %1292 = vdwg.mxu0
        %v1294 = vsel %vm913, %v1196, 0
        %1296 = vmatprep.subr.bf16.mxu0 0
        %1297 = vmatpush1.bf16.msra.mxu0 %v1205
        %1298 = vmatprep.subr.bf16.mxu0 0
        %1299 = vmatpush1.bf16.msra.mxu0 0
        %1300 = vmatprep.subr.bf16.mxu0 0
        %1301 = vmatpush1.bf16.msra.mxu0 0
        %1302 = vmatprep.subr.bf16.mxu0 0
        %1303 = vmatpush1.bf16.msra.mxu0 0
        %1304 = vmatprep.subr.bf16.mxu0 0
        %1305 = vmatpush1.bf16.msra.mxu0 0
        %1306 = vmatprep.subr.bf16.mxu0 0
        %1307 = vmatpush1.bf16.msra.mxu0 0
        %1308 = vmatprep.subr.bf16.mxu0 0
        %1309 = vmatpush1.bf16.msra.mxu0 0
        %1310 = vmatprep.subr.bf16.mxu0 0
        %1311 = vmatpush1.bf16.msra.mxu0 0
        %1312 = vmatprep.subr.bf16.mxu0 0
        %1313 = vmatpush1.bf16.msra.mxu0 0
        %1314 = vmatprep.subr.bf16.mxu0 0
        %1315 = vmatpush1.bf16.msra.mxu0 0
        %1316 = vmatprep.subr.bf16.mxu0 0
        %1317 = vmatpush1.bf16.msra.mxu0 0
        %1318 = vmatprep.subr.bf16.mxu0 0
        %1319 = vmatpush1.bf16.msra.mxu0 0
        %1320 = vmatprep.subr.bf16.mxu0 0
        %1321 = vmatpush1.bf16.msra.mxu0 0
        %1322 = vmatprep.subr.bf16.mxu0 0
        %1323 = vmatpush1.bf16.msra.mxu0 0
        %1324 = vmatprep.subr.bf16.mxu0 0
        %1325 = vmatpush1.bf16.msra.mxu0 0
        %1326 = vmatprep.subr.bf16.mxu0 0
        %1327 = vmatpush1.bf16.msra.mxu0 0
        %1328 = vmatprep.mubr.bf16.mxu0 0
        %1329 = vmatmul.mubr.bf16.gmra.mrb[0].mxu0 %v1294
        %v1330 = vpop.f32.mrb[0].mxu0
        %v1331 = vadd.f32 0.0, %v1330
        %v1332 = vpop.f32.mrb[0].mxu0
        %v1333 = vpop.f32.mrb[0].mxu0
        %v1334 = vpop.f32.mrb[0].mxu0
        %1335 = vdwg.mxu0
        %v1337 = vsel %vm913, %v1197, 0
        %1339 = vmatprep.subr.bf16.mxu0 0
        %1340 = vmatpush1.bf16.msra.mxu0 %v1251
        %1341 = vmatprep.subr.bf16.mxu0 0
        %1342 = vmatpush1.bf16.msra.mxu0 0
        %1343 = vmatprep.subr.bf16.mxu0 0
        %1344 = vmatpush1.bf16.msra.mxu0 0
        %1345 = vmatprep.subr.bf16.mxu0 0
        %1346 = vmatpush1.bf16.msra.mxu0 0
        %1347 = vmatprep.subr.bf16.mxu0 0
        %1348 = vmatpush1.bf16.msra.mxu0 0
        %1349 = vmatprep.subr.bf16.mxu0 0
        %1350 = vmatpush1.bf16.msra.mxu0 0
        %1351 = vmatprep.subr.bf16.mxu0 0
        %1352 = vmatpush1.bf16.msra.mxu0 0
        %1353 = vmatprep.subr.bf16.mxu0 0
        %1354 = vmatpush1.bf16.msra.mxu0 0
        %1355 = vmatprep.subr.bf16.mxu0 0
        %1356 = vmatpush1.bf16.msra.mxu0 0
        %1357 = vmatprep.subr.bf16.mxu0 0
        %1358 = vmatpush1.bf16.msra.mxu0 0
        %1359 = vmatprep.subr.bf16.mxu0 0
        %1360 = vmatpush1.bf16.msra.mxu0 0
        %1361 = vmatprep.subr.bf16.mxu0 0
        %1362 = vmatpush1.bf16.msra.mxu0 0
        %1363 = vmatprep.subr.bf16.mxu0 0
        %1364 = vmatpush1.bf16.msra.mxu0 0
        %1365 = vmatprep.subr.bf16.mxu0 0
        %1366 = vmatpush1.bf16.msra.mxu0 0
        %1367 = vmatprep.subr.bf16.mxu0 0
        %1368 = vmatpush1.bf16.msra.mxu0 0
        %1369 = vmatprep.subr.bf16.mxu0 0
        %1370 = vmatpush1.bf16.msra.mxu0 0
        %1371 = vmatprep.mubr.bf16.mxu0 0
        %1372 = vmatmul.mubr.bf16.gmra.mrb[0].mxu0 %v1337
        %v1373 = vpop.f32.mrb[0].mxu0
        %v1374 = vadd.f32 0.0, %v1373
        %v1375 = vpop.f32.mrb[0].mxu0
        %v1376 = vpop.f32.mrb[0].mxu0
        %v1377 = vpop.f32.mrb[0].mxu0
        %1378 = vdwg.mxu0
        %1380 = vrot.lane.b32.xlu0 %v1288, 16
        %v1381 = vpop.permute.xlu0 %1380
        %1384 = vrot.lane.b32.xlu0 %v1331, 32
        %v1385 = vpop.permute.xlu0 %1384
        %1388 = vrot.lane.b32.xlu0 %v1374, 48
        %v1389 = vpop.permute.xlu0 %1388
        %v1391 = vsel %vm956, %v1242, %v1381
        %v1392 = vsel %vm653, %v1391, %v1385
        %vm1393 = vcmask 392192
        %v1394 = vsel %vm1393, %v1392, %v1389
        %v1395 = vpack.c.bf16 %v1394, %v1394
        %v1396 = vld [vmem:[%s10] sm:$0xf]
        %v1397 = vld [vmem:[%s10 + $0x4] sm:$0xf]
        %v1398 = vld [vmem:[%s10 + $0x8] sm:$0xf]
        %v1399 = vld [vmem:[%s10 + $0xc] sm:$0xf]
        %v1400 = vld [vmem:[%s10 + $0x10] sm:$0xf]
        %v1401 = vld [vmem:[%s10 + $0x14] sm:$0xf]
        %v1402 = vld [vmem:[%s10 + $0x18] sm:$0xf]
        %v1403 = vld [vmem:[%s10 + $0x1c] sm:$0xf]
        %v1404 = vld [vmem:[%s11] sm:$0x1]
        %v1406 = vlaneseq
        %v1407 = vshrl.u32 %v1406, 7
        %v1408 = vsub.s32 0, %v1407
        %v1409 = vrot.slane %v1404, %v1408
        %v1419 = vunpack.c.l.b16 %v1396
        %v1420 = vunpack.c.l.b16 %v1397
        %v1421 = vunpack.c.l.b16 %v1398
        %v1422 = vunpack.c.l.b16 %v1399
        %v1423 = vunpack.c.l.b16 %v1400
        %v1424 = vunpack.c.l.b16 %v1401
        %v1425 = vunpack.c.l.b16 %v1402
        %v1426 = vunpack.c.l.b16 %v1403
        %v1427 = vpack.c.b16 %v1420, %v1419
        %v1428 = vpack.c.b16 %v1422, %v1421
        %v1429 = vpack.c.b16 %v1424, %v1423
        %v1430 = vpack.c.b16 %v1426, %v1425
        %vm1435 = vcmask 523264
        %v1437 = vsel %vm1435, %v1395, 0
        %1439 = vmatprep.subr.bf16.mxu0 0
        %1440 = vmatpush1.bf16.msra.mxu0 %v1427
        %1441 = vmatprep.subr.bf16.mxu0 0
        %1442 = vmatpush1.bf16.msra.mxu0 %v1428
        %1443 = vmatprep.subr.bf16.mxu0 0
        %1444 = vmatpush1.bf16.msra.mxu0 %v1429
        %1445 = vmatprep.subr.bf16.mxu0 0
        %1446 = vmatpush1.bf16.msra.mxu0 %v1430
        %1447 = vmatprep.subr.bf16.mxu0 0
        %1448 = vmatpush1.bf16.msra.mxu0 0
        %1449 = vmatprep.subr.bf16.mxu0 0
        %1450 = vmatpush1.bf16.msra.mxu0 0
        %1451 = vmatprep.subr.bf16.mxu0 0
        %1452 = vmatpush1.bf16.msra.mxu0 0
        %1453 = vmatprep.subr.bf16.mxu0 0
        %1454 = vmatpush1.bf16.msra.mxu0 0
        %1455 = vmatprep.subr.bf16.mxu0 0
        %1456 = vmatpush1.bf16.msra.mxu0 0
        %1457 = vmatprep.subr.bf16.mxu0 0
        %1458 = vmatpush1.bf16.msra.mxu0 0
        %1459 = vmatprep.subr.bf16.mxu0 0
        %1460 = vmatpush1.bf16.msra.mxu0 0
        %1461 = vmatprep.subr.bf16.mxu0 0
        %1462 = vmatpush1.bf16.msra.mxu0 0
        %1463 = vmatprep.subr.bf16.mxu0 0
        %1464 = vmatpush1.bf16.msra.mxu0 0
        %1465 = vmatprep.subr.bf16.mxu0 0
        %1466 = vmatpush1.bf16.msra.mxu0 0
        %1467 = vmatprep.subr.bf16.mxu0 0
        %1468 = vmatpush1.bf16.msra.mxu0 0
        %1469 = vmatprep.subr.bf16.mxu0 0
        %1470 = vmatpush1.bf16.msra.mxu0 0
        %1471 = vmatprep.mubr.bf16.mxu0 0
        %1472 = vmatmul.mubr.bf16.gmra.mrb[0].mxu0 %v1437
        %v1473 = vpop.f32.mrb[0].mxu0
        %v1474 = vadd.f32 %v1409, %v1473
        %v1475 = vpop.f32.mrb[0].mxu0
        %v1476 = vpop.f32.mrb[0].mxu0
        %v1477 = vpop.f32.mrb[0].mxu0
        %1478 = vdwg.mxu0
        %v1479 = vadd.f32 %v650, %v1474
        %v1480 = vld [vmem:[%s12] sm:$0x1]
        %v1481 = vmul.f32 %v1479, %v1479
        %v1482 = vsel %vm653, %v1481, 0.0
        %1483 = vadd.xlane.f32.xlu0 %v1482
        %v1484 = vpop.xlane.xlu0 %1483
        %v1485 = vmul.f32 %v1484, %v657
        %v1486 = vrsqrt.pop %v1485
        %v1487 = vmul.f32 %v1485, %v1486
        %vm1488 = vcmp.eq.f32.partialorder %v1485, inf
        %v1489 = vsel %vm1488, %v1485, %v1487
        %vm1490 = vcmp.eq.f32.partialorder %v1485, 0.0
        %v1491 = vand.u32 %v1485, 2147483648
        %v1492 = vsel %vm1490, %v1491, %v1489
        %v1493 = vadd.f32 %v1492, 1e-06
        %v1494 = vrcp.pop %v1493
        %v1496 = vlaneseq
        %v1497 = vshrl.u32 %v1496, 7
        %v1498 = vsub.s32 0, %v1497
        %v1499 = vrot.slane %v1480, %v1498
        %v1501 = vmul.f32 %v1499, %v1479
        %v1502 = vmul.f32 %v1501, %v1494
        %v1503 = vpack.c.bf16 %v1502, %v1502
        %v1504 = vld [vmem:[%s13] sm:$0xf]
        %v1505 = vld [vmem:[%s13 + $0x4] sm:$0xf]
        %v1506 = vld [vmem:[%s13 + $0x8] sm:$0xf]
        %v1507 = vld [vmem:[%s13 + $0xc] sm:$0xf]
        %v1508 = vld [vmem:[%s14] sm:$0x1]
        %v1510 = vlaneseq
        %v1511 = vshrl.u32 %v1510, 7
        %v1512 = vsub.s32 0, %v1511
        %v1513 = vrot.slane %v1508, %v1512
        %v1519 = vunpack.c.l.b16 %v1504
        %v1520 = vunpack.c.l.b16 %v1505
        %v1521 = vunpack.c.l.b16 %v1506
        %v1522 = vunpack.c.l.b16 %v1507
        %v1523 = vpack.c.b16 %v1520, %v1519
        %v1524 = vpack.c.b16 %v1522, %v1521
        %v1528 = vsel %vm653, %v1503, 0
        %1530 = vmatprep.subr.bf16.mxu0 0
        %1531 = vmatpush1.bf16.msra.mxu0 %v1523
        %1532 = vmatprep.subr.bf16.mxu0 0
        %1533 = vmatpush1.bf16.msra.mxu0 %v1524
        %1534 = vmatprep.subr.bf16.mxu0 0
        %1535 = vmatpush1.bf16.msra.mxu0 0
        %1536 = vmatprep.subr.bf16.mxu0 0
        %1537 = vmatpush1.bf16.msra.mxu0 0
        %1538 = vmatprep.subr.bf16.mxu0 0
        %1539 = vmatpush1.bf16.msra.mxu0 0
        %1540 = vmatprep.subr.bf16.mxu0 0
        %1541 = vmatpush1.bf16.msra.mxu0 0
        %1542 = vmatprep.subr.bf16.mxu0 0
        %1543 = vmatpush1.bf16.msra.mxu0 0
        %1544 = vmatprep.subr.bf16.mxu0 0
        %1545 = vmatpush1.bf16.msra.mxu0 0
        %1546 = vmatprep.subr.bf16.mxu0 0
        %1547 = vmatpush1.bf16.msra.mxu0 0
        %1548 = vmatprep.subr.bf16.mxu0 0
        %1549 = vmatpush1.bf16.msra.mxu0 0
        %1550 = vmatprep.subr.bf16.mxu0 0
        %1551 = vmatpush1.bf16.msra.mxu0 0
        %1552 = vmatprep.subr.bf16.mxu0 0
        %1553 = vmatpush1.bf16.msra.mxu0 0
        %1554 = vmatprep.subr.bf16.mxu0 0
        %1555 = vmatpush1.bf16.msra.mxu0 0
        %1556 = vmatprep.subr.bf16.mxu0 0
        %1557 = vmatpush1.bf16.msra.mxu0 0
        %1558 = vmatprep.subr.bf16.mxu0 0
        %1559 = vmatpush1.bf16.msra.mxu0 0
        %1560 = vmatprep.subr.bf16.mxu0 0
        %1561 = vmatpush1.bf16.msra.mxu0 0
        %1562 = vmatprep.mubr.bf16.mxu0 0
        %1563 = vmatmul.mubr.bf16.gmra.mrb[0].mxu0 %v1528
        %v1564 = vpop.f32.mrb[0].mxu0
        %v1565 = vadd.f32 %v1513, %v1564
        %v1566 = vpop.f32.mrb[0].mxu0
        %v1567 = vpop.f32.mrb[0].mxu0
        %v1568 = vpop.f32.mrb[0].mxu0
        %1569 = vdwg.mxu0
        %v1570 = vld [vmem:[%s15] sm:$0xf]
        %v1571 = vld [vmem:[%s15 + $0x4] sm:$0xf]
        %v1572 = vld [vmem:[%s15 + $0x8] sm:$0xf]
        %v1573 = vld [vmem:[%s15 + $0xc] sm:$0xf]
        %v1574 = vld [vmem:[%s16] sm:$0x1]
        %v1576 = vlaneseq
        %v1577 = vshrl.u32 %v1576, 7
        %v1578 = vsub.s32 0, %v1577
        %v1579 = vrot.slane %v1574, %v1578
        %v1585 = vunpack.c.l.b16 %v1570
        %v1586 = vunpack.c.l.b16 %v1571
        %v1587 = vunpack.c.l.b16 %v1572
        %v1588 = vunpack.c.l.b16 %v1573
        %v1589 = vpack.c.b16 %v1586, %v1585
        %v1590 = vpack.c.b16 %v1588, %v1587
        %1593 = vmatprep.subr.bf16.mxu0 0
        %1594 = vmatpush1.bf16.msra.mxu0 %v1589
        %1595 = vmatprep.subr.bf16.mxu0 0
        %1596 = vmatpush1.bf16.msra.mxu0 %v1590
        %1597 = vmatprep.subr.bf16.mxu0 0
        %1598 = vmatpush1.bf16.msra.mxu0 0
        %1599 = vmatprep.subr.bf16.mxu0 0
        %1600 = vmatpush1.bf16.msra.mxu0 0
        %1601 = vmatprep.subr.bf16.mxu0 0
        %1602 = vmatpush1.bf16.msra.mxu0 0
        %1603 = vmatprep.subr.bf16.mxu0 0
        %1604 = vmatpush1.bf16.msra.mxu0 0
        %1605 = vmatprep.subr.bf16.mxu0 0
        %1606 = vmatpush1.bf16.msra.mxu0 0
        %1607 = vmatprep.subr.bf16.mxu0 0
        %1608 = vmatpush1.bf16.msra.mxu0 0
        %1609 = vmatprep.subr.bf16.mxu0 0
        %1610 = vmatpush1.bf16.msra.mxu0 0
        %1611 = vmatprep.subr.bf16.mxu0 0
        %1612 = vmatpush1.bf16.msra.mxu0 0
        %1613 = vmatprep.subr.bf16.mxu0 0
        %1614 = vmatpush1.bf16.msra.mxu0 0
        %1615 = vmatprep.subr.bf16.mxu0 0
        %1616 = vmatpush1.bf16.msra.mxu0 0
        %1617 = vmatprep.subr.bf16.mxu0 0
        %1618 = vmatpush1.bf16.msra.mxu0 0
        %1619 = vmatprep.subr.bf16.mxu0 0
        %1620 = vmatpush1.bf16.msra.mxu0 0
        %1621 = vmatprep.subr.bf16.mxu0 0
        %1622 = vmatpush1.bf16.msra.mxu0 0
        %1623 = vmatprep.subr.bf16.mxu0 0
        %1624 = vmatpush1.bf16.msra.mxu0 0
        %1625 = vmatprep.mubr.bf16.mxu0 0
        %1626 = vmatmul.mubr.bf16.gmra.mrb[0].mxu0 %v1528
        %v1627 = vpop.f32.mrb[0].mxu0
        %v1628 = vadd.f32 %v1579, %v1627
        %v1629 = vpop.f32.mrb[0].mxu0
        %v1630 = vpop.f32.mrb[0].mxu0
        %v1631 = vpop.f32.mrb[0].mxu0
        %1632 = vdwg.mxu0
        %v1633 = vxor.u32 %v1628, 2147483648
        %v1634 = vmul.f32 %v1633, 1.442695
        %v1635 = vpow.pop %v1634
        %v1636 = vadd.f32 %v1635, 1.0
        %v1637 = vrcp.pop %v1636
        %v1638 = vmul.f32 1.0, %v1637
        %v1639 = vmul.f32 %v1628, %v1638
        %v1640 = vmul.f32 %v1565, %v1639
        %v1641 = vpack.c.bf16 %v1640, %v1640
        %v1642 = vld [vmem:[%s17] sm:$0xf]
        %v1643 = vld [vmem:[%s17 + $0x4] sm:$0xf]
        %v1644 = vld [vmem:[%s17 + $0x8] sm:$0xf]
        %v1645 = vld [vmem:[%s17 + $0xc] sm:$0xf]
        %v1646 = vld [vmem:[%s17 + $0x10] sm:$0xf]
        %v1647 = vld [vmem:[%s17 + $0x14] sm:$0xf]
        %v1648 = vld [vmem:[%s17 + $0x18] sm:$0xf]
        %v1649 = vld [vmem:[%s17 + $0x1c] sm:$0xf]
        %v1650 = vld [vmem:[%s18] sm:$0x1]
        %v1652 = vlaneseq
        %v1653 = vshrl.u32 %v1652, 7
        %v1654 = vsub.s32 0, %v1653
        %v1655 = vrot.slane %v1650, %v1654
        %v1665 = vunpack.c.l.b16 %v1642
        %v1666 = vunpack.c.l.b16 %v1643
        %v1667 = vunpack.c.l.b16 %v1644
        %v1668 = vunpack.c.l.b16 %v1645
        %v1669 = vunpack.c.l.b16 %v1646
        %v1670 = vunpack.c.l.b16 %v1647
        %v1671 = vunpack.c.l.b16 %v1648
        %v1672 = vunpack.c.l.b16 %v1649
        %v1673 = vpack.c.b16 %v1666, %v1665
        %v1674 = vpack.c.b16 %v1668, %v1667
        %v1675 = vpack.c.b16 %v1670, %v1669
        %v1676 = vpack.c.b16 %v1672, %v1671
        %v1682 = vsel %vm1435, %v1641, 0
        %1684 = vmatprep.subr.bf16.mxu0 0
        %1685 = vmatpush1.bf16.msra.mxu0 %v1673
        %1686 = vmatprep.subr.bf16.mxu0 0
        %1687 = vmatpush1.bf16.msra.mxu0 %v1674
        %1688 = vmatprep.subr.bf16.mxu0 0
        %1689 = vmatpush1.bf16.msra.mxu0 %v1675
        %1690 = vmatprep.subr.bf16.mxu0 0
        %1691 = vmatpush1.bf16.msra.mxu0 %v1676
        %1692 = vmatprep.subr.bf16.mxu0 0
        %1693 = vmatpush1.bf16.msra.mxu0 0
        %1694 = vmatprep.subr.bf16.mxu0 0
        %1695 = vmatpush1.bf16.msra.mxu0 0
        %1696 = vmatprep.subr.bf16.mxu0 0
        %1697 = vmatpush1.bf16.msra.mxu0 0
        %1698 = vmatprep.subr.bf16.mxu0 0
        %1699 = vmatpush1.bf16.msra.mxu0 0
        %1700 = vmatprep.subr.bf16.mxu0 0
        %1701 = vmatpush1.bf16.msra.mxu0 0
        %1702 = vmatprep.subr.bf16.mxu0 0
        %1703 = vmatpush1.bf16.msra.mxu0 0
        %1704 = vmatprep.subr.bf16.mxu0 0
        %1705 = vmatpush1.bf16.msra.mxu0 0
        %1706 = vmatprep.subr.bf16.mxu0 0
        %1707 = vmatpush1.bf16.msra.mxu0 0
        %1708 = vmatprep.subr.bf16.mxu0 0
        %1709 = vmatpush1.bf16.msra.mxu0 0
        %1710 = vmatprep.subr.bf16.mxu0 0
        %1711 = vmatpush1.bf16.msra.mxu0 0
        %1712 = vmatprep.subr.bf16.mxu0 0
        %1713 = vmatpush1.bf16.msra.mxu0 0
        %1714 = vmatprep.subr.bf16.mxu0 0
        %1715 = vmatpush1.bf16.msra.mxu0 0
        %1716 = vmatprep.mubr.bf16.mxu0 0
        %1717 = vmatmul.mubr.bf16.gmra.mrb[0].mxu0 %v1682
        %v1718 = vpop.f32.mrb[0].mxu0
        %v1719 = vadd.f32 %v1655, %v1718
        %v1720 = vpop.f32.mrb[0].mxu0
        %v1721 = vpop.f32.mrb[0].mxu0
        %v1722 = vpop.f32.mrb[0].mxu0
        %1723 = vdwg.mxu0
        %v1724 = vadd.f32 %v1479, %v1719
        %1725 = vst.msk [vmem:[%s644] sm:$0xff] %vm653, %v1724
        %s1726 = sand.u32 %s448, 1
        %s1727 = scalar_lea.sflag [#allocation4], %s1726
        %s1728 = sand.u32 %s448, 1
        %s1729 = smul.addr %s1728, 8
        %s1730 = scalar_lea.vmem [#allocation10], %s1729
        // Predicated region
        $region113: #{tpu_custom_call.1} parent=95 // pred_check
          %p1731 = pneg %p458
        $region114: #{tpu_custom_call.1} parent=95 // pred_check_branch
          %1733 = sbr.rel (%p1731) target = $region116
        $region115: #{tpu_custom_call.1} parent=95 // pred_region
          %s1735 = ssub.s32 128, 128
          %1736 = vsyncadd %s1727, %s1735
          %s1737 = smul.addr %s36, 128
          %s1738 = scalar_lea.hbm %s19, %s1737
          %s1740 = sshll.u32 %s1730, 4
          %s1741 = int_to_ptr.vmem [resolvable:$true] %s1740
          %1743 = dma.vmem_to_hbm [thread:$0]  %s1741, 128, %s1738, %s1727
        $region116: #{tpu_custom_call.1} parent=95 // pred_fallthru
          _
      $region96: #{tpu_custom_call.1} parent=5 // pred_fallthru
        _
      %p1744 = scmp.le.s32.totalorder 2, %s31
      // Predicated region
      $region117: #{tpu_custom_call.1} parent=5 // pred_check
        %p1745 = pneg %p1744
      $region118: #{tpu_custom_call.1} parent=5 // pred_check_branch
        %1747 = sbr.rel (%p1745) target = $region120
      $region119: #{tpu_custom_call.1} parent=5 // pred_region
        %s1748 = ssub.s32 %s31, 2
        // Predicated region
        $region121: #{tpu_custom_call.1} parent=119 // pred_check
          %p1749 = pneg %p464
        $region122: #{tpu_custom_call.1} parent=119 // pred_check_branch
          %1751 = sbr.rel (%p1749) target = $region124
        $region123: #{tpu_custom_call.1} parent=119 // pred_region
          %s1752 = sand.u32 %s449, 1
          %s1753 = scalar_lea.sflag [#allocation4], %s1752
          %s1754 = sand.u32 %s449, 1
          %s1755 = smul.addr %s1754, 8
          %s1756 = scalar_lea.vmem [#allocation10], %s1755
          %1757 = dma.done %s1753, 128
        $region124: #{tpu_custom_call.1} parent=119 // pred_fallthru
          _
      $region120: #{tpu_custom_call.1} parent=5 // pred_fallthru
        _
    $region6: #{tpu_custom_call.1} parent=1 // loop_footer
      %s35 = sadd.s32 1, %s31
    $region7: #{tpu_custom_call.1} parent=1 // loop_footer_branch
      %30 = sbr.rel target = $region3
    $region8: #{tpu_custom_call.1} parent=1 // loop_exit
      _
    %1758 = vsyncpa [#allocation3], 1
    %s1759 = scalar_lea.sflag [#allocation3], 1
    %1760 = vsyncpa %s1759, 1
    %1761 = vsyncpa [#allocation6], 1
    %1762 = vsyncpa [#allocation9], 1
    %1763 = vsyncpa [#allocation4], 1
    %s1764 = scalar_lea.sflag [#allocation4], 1
    %1765 = vsyncpa %s1764, 1

</llo_original>
